<compile_context>
chip_gen: v7x
topology: tpu7x:2x2x1
jax: 0.10.0
libtpu: 0.0.40
codegen_flags: <defaults>
</compile_context>

<pallas_src>
import jax
import jax.numpy as jnp
import numpy as np
from jax.experimental import pallas as pl
from jax.experimental.pallas import tpu as pltpu


def _round_up(x, m):
    return ((x + m - 1) // m) * m


def encoder_kernel(patches_ref, wp_ref, bp_ref, wc_ref, bc_ref, out_ref):
    # patches_ref: (TM, K)        bf16   flattened patches for this batch tile
    # wp_ref:      (K, D)         bf16   pool-folded patch-embed weight (backbone stand-in)
    # bp_ref:      (1, D)         f32    synthetic patch-embed bias
    # wc_ref:      (D, OUT_PAD)   bf16   compression Linear weight (lane-padded)
    # bc_ref:      (1, OUT_PAD)   f32    compression Linear bias   (lane-padded)
    # out_ref:     (TM, OUT_PAD)  bf16
    #
    # Backbone stand-in: (patch-embed + global mean pool) folded into one matmul.
    feat = jnp.dot(patches_ref[...], wp_ref[...],
                   preferred_element_type=jnp.float32)              # (TM, D) f32
    feat = feat + bp_ref[...]

    # Compression head: Linear(D -> 784) + ReLU(inplace=True).
    out = jnp.dot(feat.astype(jnp.bfloat16), wc_ref[...],
                  preferred_element_type=jnp.float32)               # (TM, OUT_PAD) f32
    out = out + bc_ref[...]
    out_ref[...] = jnp.maximum(out, 0.0).astype(out_ref.dtype)


def encoder_forward(img_nchw, wp, bp, wc, bc, patch):
    """img_nchw: [B, C, H, W] float32 -> [B, 784] float32."""
    B, C, H, W = img_nchw.shape
    assert H % patch == 0 and W % patch == 0
    nh, nw = H // patch, W // patch
    Np = nh * nw
    Pd = C * patch * patch
    K = Np * Pd
    D = wp.shape[1]
    out_dim = wc.shape[1]

    # Patchify directly to the 2-D (B, Np*Pd) layout the kernel consumes; bf16
    # halves the only batch-scaling HBM->VMEM transfer.
    x = img_nchw.reshape(B, C, nh, patch, nw, patch)
    x = jnp.transpose(x, (0, 2, 4, 1, 3, 5))                        # [B, nh, nw, C, P, P]
    patches = x.reshape(B, K).astype(jnp.bfloat16)

    # M tile: 256-aligned at realistic batch (MXU-dense on v6e/v7x), otherwise
    # round the batch up to the bf16 sublane-packing granule (16).
    TM = 256 if B >= 256 else _round_up(B, 16)
    B_pad = _round_up(B, TM)
    OUT_PAD = _round_up(out_dim, 128)                               # 784 -> 896

    if B_pad != B:
        patches = jnp.pad(patches, ((0, B_pad - B), (0, 0)))

    # Fold the global mean pool into the patch-embed weight (exact because the
    # stand-in backbone is affine before pooling).
    wp_eff = (jnp.tile(wp, (Np, 1)) * (1.0 / Np)).astype(jnp.bfloat16)   # (K, D)
    wc_p = jnp.pad(wc, ((0, 0), (0, OUT_PAD - out_dim))).astype(jnp.bfloat16)
    bc_p = jnp.pad(bc, ((0, 0), (0, OUT_PAD - out_dim)))

    grid = (B_pad // TM,)
    out_full = pl.pallas_call(
        encoder_kernel,
        out_shape=jax.ShapeDtypeStruct((B_pad, OUT_PAD), jnp.bfloat16),
        grid=grid,
        in_specs=[
            pl.BlockSpec((TM, K), lambda i: (i, 0)),        # patches: per batch tile
            pl.BlockSpec((K, D), lambda i: (0, 0)),         # wp_eff: resident
            pl.BlockSpec((1, D), lambda i: (0, 0)),         # bp:     resident
            pl.BlockSpec((D, OUT_PAD), lambda i: (0, 0)),   # wc:     resident
            pl.BlockSpec((1, OUT_PAD), lambda i: (0, 0)),   # bc:     resident
        ],
        out_specs=pl.BlockSpec((TM, OUT_PAD), lambda i: (i, 0)),
        compiler_params=pltpu.CompilerParams(
            dimension_semantics=("parallel",),              # shard batch tiles across TCs
        ),
    )(patches, wp_eff, bp, wc_p, bc_p)

    return out_full[:B, :out_dim].astype(jnp.float32)


def reference_forward(img_nchw, wp, bp, wc, bc, patch):
    B, C, H, W = img_nchw.shape
    nh, nw = H // patch, W // patch
    x = img_nchw.reshape(B, C, nh, patch, nw, patch)
    x = jnp.transpose(x, (0, 2, 4, 1, 3, 5)).reshape(B, nh * nw, C * patch * patch)
    emb = jnp.einsum("bnp,pd->bnd", x, wp) + bp          # synthetic backbone
    feat = emb.mean(axis=1)                              # global_pool
    out = feat @ wc + bc                                 # nn.Linear(D, 784)
    return jnp.maximum(out, 0.0)                         # nn.ReLU(True)


if __name__ == "__main__":
    # Small shapes consistent with the module's forward contract.
    B, C, H, W = 2, 4, 16, 16
    patch = 8
    pretrained_rep_dim = 384      # backbone feature dim (ViT-small-ish)
    output_rep_dim = 784          # fixed in the module

    Pd = C * patch * patch

    key = jax.random.PRNGKey(0)
    k_img, k_wp, k_bp, k_wc, k_bc = jax.random.split(key, 5)

    img = jax.random.normal(k_img, (B, C, H, W), dtype=jnp.float32)

    # Deterministic parameter init (synthetic; no checkpoint loading).
    wp = jax.random.normal(k_wp, (Pd, pretrained_rep_dim), dtype=jnp.float32) * (1.0 / np.sqrt(Pd))
    bp = jax.random.normal(k_bp, (1, pretrained_rep_dim), dtype=jnp.float32) * 0.01
    wc = jax.random.normal(k_wc, (pretrained_rep_dim, output_rep_dim), dtype=jnp.float32) * (
        1.0 / np.sqrt(pretrained_rep_dim)
    )
    bc = jax.random.normal(k_bc, (1, output_rep_dim), dtype=jnp.float32) * 0.01

    out = encoder_forward(img, wp, bp, wc, bc, patch)
    out = jax.block_until_ready(out)

    ref = reference_forward(img, wp, bp, wc, bc, patch)
    # Tolerance accounts for bf16 activation/weight quantization on the MXU and
    # the bf16 output store (f32 accumulation in-kernel).
    np.testing.assert_allclose(np.asarray(out), np.asarray(ref), rtol=3e-2, atol=3e-2)
    assert out.shape == (B, output_rep_dim)

    print("KERNEL_OK")
</pallas_src>

<mosaic_0001>
module attributes {stable_mosaic.version = 11 : i64} {
  func.func @encoder_kernel(%arg0: i32, %arg1: memref<16x1024xbf16, #tpu.memory_space<vmem>>, %arg2: memref<1024x384xbf16, #tpu.memory_space<vmem>>, %arg3: memref<1x384xf32, #tpu.memory_space<vmem>>, %arg4: memref<384x896xbf16, #tpu.memory_space<vmem>>, %arg5: memref<1x896xf32, #tpu.memory_space<vmem>>, %arg6: memref<16x896xbf16, #tpu.memory_space<vmem>>) attributes {dimension_semantics = [#tpu.dimension_semantics<parallel>], iteration_bounds = array<i64: 1>, scalar_prefetch = 0 : i64, scratch_operands = 0 : i64, tpu.core_type = #tpu.core_type<tc>, window_params = [{transform_indices = @transform_0, window_bounds = array<i64: 16, 1024>}, {pipeline_mode = #tpu.pipeline_mode<synchronous>, transform_indices = @transform_1, window_bounds = array<i64: 1024, 384>}, {pipeline_mode = #tpu.pipeline_mode<synchronous>, transform_indices = @transform_2, window_bounds = array<i64: 1, 384>}, {pipeline_mode = #tpu.pipeline_mode<synchronous>, transform_indices = @transform_3, window_bounds = array<i64: 384, 896>}, {pipeline_mode = #tpu.pipeline_mode<synchronous>, transform_indices = @transform_4, window_bounds = array<i64: 1, 896>}, {transform_indices = @transform_5, window_bounds = array<i64: 16, 896>}]} {
    %c0 = arith.constant 0 : index
    %c0_0 = arith.constant 0 : index
    %0 = vector.load %arg1[%c0, %c0_0] : memref<16x1024xbf16, #tpu.memory_space<vmem>>, vector<16x1024xbf16>
    %c0_1 = arith.constant 0 : index
    %c0_2 = arith.constant 0 : index
    %1 = vector.load %arg2[%c0_1, %c0_2] : memref<1024x384xbf16, #tpu.memory_space<vmem>>, vector<1024x384xbf16>
    %cst = arith.constant dense<0.000000e+00> : vector<16x384xf32>
    %2 = tpu.matmul %0, %1, %cst {dimension_numbers = #tpu.dot_dimension_numbers<[1], [0], [0], [1], [0, 0, 1, 1], [], []>} : vector<16x1024xbf16>, vector<1024x384xbf16>, vector<16x384xf32> -> vector<16x384xf32>
    %c0_3 = arith.constant 0 : index
    %c0_4 = arith.constant 0 : index
    %3 = vector.load %arg3[%c0_3, %c0_4] : memref<1x384xf32, #tpu.memory_space<vmem>>, vector<1x384xf32>
    %4 = vector.broadcast %3 : vector<1x384xf32> to vector<16x384xf32>
    %5 = arith.addf %2, %4 : vector<16x384xf32>
    %6 = arith.truncf %5 : vector<16x384xf32> to vector<16x384xbf16>
    %c0_5 = arith.constant 0 : index
    %c0_6 = arith.constant 0 : index
    %7 = vector.load %arg4[%c0_5, %c0_6] : memref<384x896xbf16, #tpu.memory_space<vmem>>, vector<384x896xbf16>
    %cst_7 = arith.constant dense<0.000000e+00> : vector<16x896xf32>
    %8 = tpu.matmul %6, %7, %cst_7 {dimension_numbers = #tpu.dot_dimension_numbers<[1], [0], [0], [1], [0, 0, 1, 1], [], []>} : vector<16x384xbf16>, vector<384x896xbf16>, vector<16x896xf32> -> vector<16x896xf32>
    %c0_8 = arith.constant 0 : index
    %c0_9 = arith.constant 0 : index
    %9 = vector.load %arg5[%c0_8, %c0_9] : memref<1x896xf32, #tpu.memory_space<vmem>>, vector<1x896xf32>
    %10 = vector.broadcast %9 : vector<1x896xf32> to vector<16x896xf32>
    %11 = arith.addf %8, %10 : vector<16x896xf32>
    %cst_10 = arith.constant 0.000000e+00 : f32
    %12 = vector.broadcast %cst_10 : f32 to vector<16x896xf32>
    %13 = arith.maximumf %11, %12 : vector<16x896xf32>
    %14 = arith.truncf %13 : vector<16x896xf32> to vector<16x896xbf16>
    %c0_11 = arith.constant 0 : index
    %c0_12 = arith.constant 0 : index
    %15 = vector.load %arg6[%c0_11, %c0_12] : memref<16x896xbf16, #tpu.memory_space<vmem>>, vector<16x896xbf16>
    tpu.vector_store %arg6[%c0_11, %c0_12], %14 {strides = array<i32>} : memref<16x896xbf16, #tpu.memory_space<vmem>>, vector<16x896xbf16>,
    return
  }
  func.func @transform_0(%arg0: i32) -> (i32, i32) {
    %c0_i32 = arith.constant 0 : i32
    %c0_i32_0 = arith.constant 0 : i32
    return %arg0, %c0_i32 : i32, i32
  }
  func.func @transform_1(%arg0: i32) -> (i32, i32) {
    %c0_i32 = arith.constant 0 : i32
    %c0_i32_0 = arith.constant 0 : i32
    %c0_i32_1 = arith.constant 0 : i32
    return %c0_i32, %c0_i32_0 : i32, i32
  }
  func.func @transform_2(%arg0: i32) -> (i32, i32) {
    %c0_i32 = arith.constant 0 : i32
    %c0_i32_0 = arith.constant 0 : i32
    %c0_i32_1 = arith.constant 0 : i32
    return %c0_i32, %c0_i32_0 : i32, i32
  }
  func.func @transform_3(%arg0: i32) -> (i32, i32) {
    %c0_i32 = arith.constant 0 : i32
    %c0_i32_0 = arith.constant 0 : i32
    %c0_i32_1 = arith.constant 0 : i32
    return %c0_i32, %c0_i32_0 : i32, i32
  }
  func.func @transform_4(%arg0: i32) -> (i32, i32) {
    %c0_i32 = arith.constant 0 : i32
    %c0_i32_0 = arith.constant 0 : i32
    %c0_i32_1 = arith.constant 0 : i32
    return %c0_i32, %c0_i32_0 : i32, i32
  }
  func.func @transform_5(%arg0: i32) -> (i32, i32) {
    %c0_i32 = arith.constant 0 : i32
    %c0_i32_0 = arith.constant 0 : i32
    return %arg0, %c0_i32 : i32, i32
  }
}

</mosaic_0001>

<llo_original>
// kernel: tpu_custom_call.1
$region0: #{tpu_custom_call.1}
  #allocation0 [shape = 'u32[]', space=smem, size = 0x4, offset = 0x4, fixed_abs, tag = 'smem constant byte address 0x4 - core index']
  #allocation1 [shape = 'u32[144,128]{1,0:T(1,128)}', space=vmem, size = 0x12000, scoped, tag = 'internal scratch']
  %s0 = inlined_call_operand.hbm [shape: bf16[16,1024], index: 0, kind: input, shape index: {}]
  %s1 = inlined_call_operand.hbm [shape: bf16[1024,384], index: 1, kind: input, shape index: {}]
  %s2 = inlined_call_operand.vmem [shape: f32[1,384], index: 2, kind: input, shape index: {}]
  %s3 = inlined_call_operand.hbm [shape: bf16[384,896], index: 3, kind: input, shape index: {}]
  %s4 = inlined_call_operand.vmem [shape: f32[1,896], index: 4, kind: input, shape index: {}]
  %s5 = inlined_call_operand.hbm [shape: bf16[16,896], index: 5, kind: output, shape index: {}]
  %s6 = sld [smem:[#allocation0]]
  $region42: #{tpu_custom_call.1} parent=0
    _
  %s8 = ssub.s32 1, %s6
  %s9 = scalar_select 0, %s8, %s6
  $region1: #{tpu_custom_call.1} parent=0
    #allocation2 [shape = 'u8[32768]{0}', space=vmem, size = 0x8000, scoped, tag = 'input window, operand 0, single buffered']
    #allocation3 [shape = 's32[1]{0}', space=sflag, size = 0x4, scoped, tag = 'scoped memory for tpu_custom_call.1']
    #allocation4 [shape = 's32[1]{0}', space=sflag, size = 0x4, scoped, tag = 'scoped memory for tpu_custom_call.1']
    #allocation5 [shape = 'u8[786432]{0}', space=vmem, size = 0xc0000, scoped, tag = 'input window, operand 1, single buffered']
    #allocation6 [shape = 's32[1]{0}', space=sflag, size = 0x4, scoped, tag = 'scoped memory for tpu_custom_call.1']
    #allocation7 [shape = 'u8[688128]{0}', space=vmem, size = 0xa8000, scoped, tag = 'input window, operand 3, single buffered']
    #allocation8 [shape = 'u8[28672]{0}', space=vmem, size = 0x7000, scoped, tag = 'output window, operand 0, single buffered']
    %10 = vsyncpa [#allocation3], 0
    %11 = vsyncpa [#allocation6], 0
    %12 = vsyncpa [#allocation4], 0
    // Predicated region
    $region2: #{tpu_custom_call.1} parent=1 // pred_check
      _
    $region3: #{tpu_custom_call.1} parent=1 // pred_check_branch
      %14 = sbr.rel (0) target = $region5
    $region4: #{tpu_custom_call.1} parent=1 // pred_region
      %s16 = ssub.s32 1024, 1024
      %17 = vsyncadd [#allocation3], %s16
      %s18 = sshll.u32 [#allocation2], 4
      %s19 = int_to_ptr.vmem [resolvable:$true] %s18
      %24 = dma.hbm_to_vmem [thread:$0]  %s0, 1024, %s19, [#allocation3], 512, 512, 32
    $region5: #{tpu_custom_call.1} parent=1 // pred_fallthru
      _
    // Predicated region
    $region6: #{tpu_custom_call.1} parent=1 // pred_check
      _
    $region7: #{tpu_custom_call.1} parent=1 // pred_check_branch
      %26 = sbr.rel (0) target = $region9
    $region8: #{tpu_custom_call.1} parent=1 // pred_region
      %s28 = ssub.s32 24576, 24576
      %29 = vsyncadd [#allocation6], %s28
      %s30 = sshll.u32 [#allocation5], 4
      %s31 = int_to_ptr.vmem [resolvable:$true] %s30
      %36 = dma.hbm_to_vmem [thread:$0]  %s1, 24576, %s31, [#allocation6], 192, 192, 12
    $region9: #{tpu_custom_call.1} parent=1 // pred_fallthru
      _
    // Predicated region
    $region10: #{tpu_custom_call.1} parent=1 // pred_check
      _
    $region11: #{tpu_custom_call.1} parent=1 // pred_check_branch
      %38 = sbr.rel (0) target = $region13
    $region12: #{tpu_custom_call.1} parent=1 // pred_region
      _
    $region13: #{tpu_custom_call.1} parent=1 // pred_fallthru
      _
    // Predicated region
    $region14: #{tpu_custom_call.1} parent=1 // pred_check
      _
    $region15: #{tpu_custom_call.1} parent=1 // pred_check_branch
      %40 = sbr.rel (0) target = $region17
    $region16: #{tpu_custom_call.1} parent=1 // pred_region
      %s42 = ssub.s32 21504, 21504
      %43 = vsyncadd [#allocation6], %s42
      %s44 = sshll.u32 [#allocation7], 4
      %s45 = int_to_ptr.vmem [resolvable:$true] %s44
      %50 = dma.hbm_to_vmem [thread:$0]  %s3, 21504, %s45, [#allocation6], 448, 448, 28
    $region17: #{tpu_custom_call.1} parent=1 // pred_fallthru
      _
    // Predicated region
    $region18: #{tpu_custom_call.1} parent=1 // pred_check
      _
    $region19: #{tpu_custom_call.1} parent=1 // pred_check_branch
      %52 = sbr.rel (0) target = $region21
    $region20: #{tpu_custom_call.1} parent=1 // pred_region
      _
    $region21: #{tpu_custom_call.1} parent=1 // pred_fallthru
      _
    // Predicated region
    $region22: #{tpu_custom_call.1} parent=1 // pred_check
      _
    $region23: #{tpu_custom_call.1} parent=1 // pred_check_branch
      %54 = sbr.rel (0) target = $region25
    $region24: #{tpu_custom_call.1} parent=1 // pred_region
      %55 = dma.done [#allocation3], 1024
    $region25: #{tpu_custom_call.1} parent=1 // pred_fallthru
      _
    // Predicated region
    $region26: #{tpu_custom_call.1} parent=1 // pred_check
      _
    $region27: #{tpu_custom_call.1} parent=1 // pred_check_branch
      %57 = sbr.rel (0) target = $region29
    $region28: #{tpu_custom_call.1} parent=1 // pred_region
      %58 = dma.done [#allocation6], 24576
    $region29: #{tpu_custom_call.1} parent=1 // pred_fallthru
      _
    // Predicated region
    $region30: #{tpu_custom_call.1} parent=1 // pred_check
      _
    $region31: #{tpu_custom_call.1} parent=1 // pred_check_branch
      %60 = sbr.rel (0) target = $region33
    $region32: #{tpu_custom_call.1} parent=1 // pred_region
      %61 = dma.done [#allocation6], 21504
    $region33: #{tpu_custom_call.1} parent=1 // pred_fallthru
      _
    %v63 = vld [vmem:[#allocation2] sm:$0xff]
    %v64 = vld [vmem:[#allocation2 + $0x8] sm:$0xff]
    %v65 = vld [vmem:[#allocation2 + $0x10] sm:$0xff]
    %v66 = vld [vmem:[#allocation2 + $0x18] sm:$0xff]
    %v67 = vld [vmem:[#allocation2 + $0x20] sm:$0xff]
    %v68 = vld [vmem:[#allocation2 + $0x28] sm:$0xff]
    %v69 = vld [vmem:[#allocation2 + $0x30] sm:$0xff]
    %v70 = vld [vmem:[#allocation2 + $0x38] sm:$0xff]
    %v71 = vld [vmem:[#allocation5] sm:$0xff]
    %v72 = vld [vmem:[#allocation5 + $0x8] sm:$0xf]
    %v73 = vld [vmem:[#allocation5 + $0xc] sm:$0xff]
    %v74 = vld [vmem:[#allocation5 + $0x14] sm:$0xf]
    %v75 = vld [vmem:[#allocation5 + $0x18] sm:$0xff]
    %v76 = vld [vmem:[#allocation5 + $0x20] sm:$0xf]
    %v77 = vld [vmem:[#allocation5 + $0x24] sm:$0xff]
    %v78 = vld [vmem:[#allocation5 + $0x2c] sm:$0xf]
    %v79 = vld [vmem:[#allocation5 + $0x30] sm:$0xff]
    %v80 = vld [vmem:[#allocation5 + $0x38] sm:$0xf]
    %v81 = vld [vmem:[#allocation5 + $0x3c] sm:$0xff]
    %v82 = vld [vmem:[#allocation5 + $0x44] sm:$0xf]
    %v83 = vld [vmem:[#allocation5 + $0x48] sm:$0xff]
    %v84 = vld [vmem:[#allocation5 + $0x50] sm:$0xf]
    %v85 = vld [vmem:[#allocation5 + $0x54] sm:$0xff]
    %v86 = vld [vmem:[#allocation5 + $0x5c] sm:$0xf]
    %v87 = vld [vmem:[#allocation5 + $0x60] sm:$0xff]
    %v88 = vld [vmem:[#allocation5 + $0x68] sm:$0xf]
    %v89 = vld [vmem:[#allocation5 + $0x6c] sm:$0xff]
    %v90 = vld [vmem:[#allocation5 + $0x74] sm:$0xf]
    %v91 = vld [vmem:[#allocation5 + $0x78] sm:$0xff]
    %v92 = vld [vmem:[#allocation5 + $0x80] sm:$0xf]
    %v93 = vld [vmem:[#allocation5 + $0x84] sm:$0xff]
    %v94 = vld [vmem:[#allocation5 + $0x8c] sm:$0xf]
    %v95 = vld [vmem:[#allocation5 + $0x90] sm:$0xff]
    %v96 = vld [vmem:[#allocation5 + $0x98] sm:$0xf]
    %v97 = vld [vmem:[#allocation5 + $0x9c] sm:$0xff]
    %v98 = vld [vmem:[#allocation5 + $0xa4] sm:$0xf]
    %v99 = vld [vmem:[#allocation5 + $0xa8] sm:$0xff]
    %v100 = vld [vmem:[#allocation5 + $0xb0] sm:$0xf]
    %v101 = vld [vmem:[#allocation5 + $0xb4] sm:$0xff]
    %v102 = vld [vmem:[#allocation5 + $0xbc] sm:$0xf]
    %v103 = vld [vmem:[#allocation5 + $0xc0] sm:$0xff]
    %v104 = vld [vmem:[#allocation5 + $0xc8] sm:$0xf]
    %v105 = vld [vmem:[#allocation5 + $0xcc] sm:$0xff]
    %v106 = vld [vmem:[#allocation5 + $0xd4] sm:$0xf]
    %v107 = vld [vmem:[#allocation5 + $0xd8] sm:$0xff]
    %v108 = vld [vmem:[#allocation5 + $0xe0] sm:$0xf]
    %v109 = vld [vmem:[#allocation5 + $0xe4] sm:$0xff]
    %v110 = vld [vmem:[#allocation5 + $0xec] sm:$0xf]
    %v111 = vld [vmem:[#allocation5 + $0xf0] sm:$0xff]
    %v112 = vld [vmem:[#allocation5 + $0xf8] sm:$0xf]
    %v113 = vld [vmem:[#allocation5 + $0xfc] sm:$0xff]
    %v114 = vld [vmem:[#allocation5 + $0x104] sm:$0xf]
    %v115 = vld [vmem:[#allocation5 + $0x108] sm:$0xff]
    %v116 = vld [vmem:[#allocation5 + $0x110] sm:$0xf]
    %v117 = vld [vmem:[#allocation5 + $0x114] sm:$0xff]
    %v118 = vld [vmem:[#allocation5 + $0x11c] sm:$0xf]
    %v119 = vld [vmem:[#allocation5 + $0x120] sm:$0xff]
    %v120 = vld [vmem:[#allocation5 + $0x128] sm:$0xf]
    %v121 = vld [vmem:[#allocation5 + $0x12c] sm:$0xff]
    %v122 = vld [vmem:[#allocation5 + $0x134] sm:$0xf]
    %v123 = vld [vmem:[#allocation5 + $0x138] sm:$0xff]
    %v124 = vld [vmem:[#allocation5 + $0x140] sm:$0xf]
    %v125 = vld [vmem:[#allocation5 + $0x144] sm:$0xff]
    %v126 = vld [vmem:[#allocation5 + $0x14c] sm:$0xf]
    %v127 = vld [vmem:[#allocation5 + $0x150] sm:$0xff]
    %v128 = vld [vmem:[#allocation5 + $0x158] sm:$0xf]
    %v129 = vld [vmem:[#allocation5 + $0x15c] sm:$0xff]
    %v130 = vld [vmem:[#allocation5 + $0x164] sm:$0xf]
    %v131 = vld [vmem:[#allocation5 + $0x168] sm:$0xff]
    %v132 = vld [vmem:[#allocation5 + $0x170] sm:$0xf]
    %v133 = vld [vmem:[#allocation5 + $0x174] sm:$0xff]
    %v134 = vld [vmem:[#allocation5 + $0x17c] sm:$0xf]
    %v135 = vld [vmem:[#allocation5 + $0x180] sm:$0xff]
    %v136 = vld [vmem:[#allocation5 + $0x188] sm:$0xf]
    %v137 = vld [vmem:[#allocation5 + $0x18c] sm:$0xff]
    %v138 = vld [vmem:[#allocation5 + $0x194] sm:$0xf]
    %v139 = vld [vmem:[#allocation5 + $0x198] sm:$0xff]
    %v140 = vld [vmem:[#allocation5 + $0x1a0] sm:$0xf]
    %v141 = vld [vmem:[#allocation5 + $0x1a4] sm:$0xff]
    %v142 = vld [vmem:[#allocation5 + $0x1ac] sm:$0xf]
    %v143 = vld [vmem:[#allocation5 + $0x1b0] sm:$0xff]
    %v144 = vld [vmem:[#allocation5 + $0x1b8] sm:$0xf]
    %v145 = vld [vmem:[#allocation5 + $0x1bc] sm:$0xff]
    %v146 = vld [vmem:[#allocation5 + $0x1c4] sm:$0xf]
    %v147 = vld [vmem:[#allocation5 + $0x1c8] sm:$0xff]
    %v148 = vld [vmem:[#allocation5 + $0x1d0] sm:$0xf]
    %v149 = vld [vmem:[#allocation5 + $0x1d4] sm:$0xff]
    %v150 = vld [vmem:[#allocation5 + $0x1dc] sm:$0xf]
    %v151 = vld [vmem:[#allocation5 + $0x1e0] sm:$0xff]
    %v152 = vld [vmem:[#allocation5 + $0x1e8] sm:$0xf]
    %v153 = vld [vmem:[#allocation5 + $0x1ec] sm:$0xff]
    %v154 = vld [vmem:[#allocation5 + $0x1f4] sm:$0xf]
    %v155 = vld [vmem:[#allocation5 + $0x1f8] sm:$0xff]
    %v156 = vld [vmem:[#allocation5 + $0x200] sm:$0xf]
    %v157 = vld [vmem:[#allocation5 + $0x204] sm:$0xff]
    %v158 = vld [vmem:[#allocation5 + $0x20c] sm:$0xf]
    %v159 = vld [vmem:[#allocation5 + $0x210] sm:$0xff]
    %v160 = vld [vmem:[#allocation5 + $0x218] sm:$0xf]
    %v161 = vld [vmem:[#allocation5 + $0x21c] sm:$0xff]
    %v162 = vld [vmem:[#allocation5 + $0x224] sm:$0xf]
    %v163 = vld [vmem:[#allocation5 + $0x228] sm:$0xff]
    %v164 = vld [vmem:[#allocation5 + $0x230] sm:$0xf]
    %v165 = vld [vmem:[#allocation5 + $0x234] sm:$0xff]
    %v166 = vld [vmem:[#allocation5 + $0x23c] sm:$0xf]
    %v167 = vld [vmem:[#allocation5 + $0x240] sm:$0xff]
    %v168 = vld [vmem:[#allocation5 + $0x248] sm:$0xf]
    %v169 = vld [vmem:[#allocation5 + $0x24c] sm:$0xff]
    %v170 = vld [vmem:[#allocation5 + $0x254] sm:$0xf]
    %v171 = vld [vmem:[#allocation5 + $0x258] sm:$0xff]
    %v172 = vld [vmem:[#allocation5 + $0x260] sm:$0xf]
    %v173 = vld [vmem:[#allocation5 + $0x264] sm:$0xff]
    %v174 = vld [vmem:[#allocation5 + $0x26c] sm:$0xf]
    %v175 = vld [vmem:[#allocation5 + $0x270] sm:$0xff]
    %v176 = vld [vmem:[#allocation5 + $0x278] sm:$0xf]
    %v177 = vld [vmem:[#allocation5 + $0x27c] sm:$0xff]
    %v178 = vld [vmem:[#allocation5 + $0x284] sm:$0xf]
    %v179 = vld [vmem:[#allocation5 + $0x288] sm:$0xff]
    %v180 = vld [vmem:[#allocation5 + $0x290] sm:$0xf]
    %v181 = vld [vmem:[#allocation5 + $0x294] sm:$0xff]
    %v182 = vld [vmem:[#allocation5 + $0x29c] sm:$0xf]
    %v183 = vld [vmem:[#allocation5 + $0x2a0] sm:$0xff]
    %v184 = vld [vmem:[#allocation5 + $0x2a8] sm:$0xf]
    %v185 = vld [vmem:[#allocation5 + $0x2ac] sm:$0xff]
    %v186 = vld [vmem:[#allocation5 + $0x2b4] sm:$0xf]
    %v187 = vld [vmem:[#allocation5 + $0x2b8] sm:$0xff]
    %v188 = vld [vmem:[#allocation5 + $0x2c0] sm:$0xf]
    %v189 = vld [vmem:[#allocation5 + $0x2c4] sm:$0xff]
    %v190 = vld [vmem:[#allocation5 + $0x2cc] sm:$0xf]
    %v191 = vld [vmem:[#allocation5 + $0x2d0] sm:$0xff]
    %v192 = vld [vmem:[#allocation5 + $0x2d8] sm:$0xf]
    %v193 = vld [vmem:[#allocation5 + $0x2dc] sm:$0xff]
    %v194 = vld [vmem:[#allocation5 + $0x2e4] sm:$0xf]
    %v195 = vld [vmem:[#allocation5 + $0x2e8] sm:$0xff]
    %v196 = vld [vmem:[#allocation5 + $0x2f0] sm:$0xf]
    %v197 = vld [vmem:[#allocation5 + $0x2f4] sm:$0xff]
    %v198 = vld [vmem:[#allocation5 + $0x2fc] sm:$0xf]
    %v199 = vld [vmem:[#allocation5 + $0x300] sm:$0xff]
    %v200 = vld [vmem:[#allocation5 + $0x308] sm:$0xf]
    %v201 = vld [vmem:[#allocation5 + $0x30c] sm:$0xff]
    %v202 = vld [vmem:[#allocation5 + $0x314] sm:$0xf]
    %v203 = vld [vmem:[#allocation5 + $0x318] sm:$0xff]
    %v204 = vld [vmem:[#allocation5 + $0x320] sm:$0xf]
    %v205 = vld [vmem:[#allocation5 + $0x324] sm:$0xff]
    %v206 = vld [vmem:[#allocation5 + $0x32c] sm:$0xf]
    %v207 = vld [vmem:[#allocation5 + $0x330] sm:$0xff]
    %v208 = vld [vmem:[#allocation5 + $0x338] sm:$0xf]
    %v209 = vld [vmem:[#allocation5 + $0x33c] sm:$0xff]
    %v210 = vld [vmem:[#allocation5 + $0x344] sm:$0xf]
    %v211 = vld [vmem:[#allocation5 + $0x348] sm:$0xff]
    %v212 = vld [vmem:[#allocation5 + $0x350] sm:$0xf]
    %v213 = vld [vmem:[#allocation5 + $0x354] sm:$0xff]
    %v214 = vld [vmem:[#allocation5 + $0x35c] sm:$0xf]
    %v215 = vld [vmem:[#allocation5 + $0x360] sm:$0xff]
    %v216 = vld [vmem:[#allocation5 + $0x368] sm:$0xf]
    %v217 = vld [vmem:[#allocation5 + $0x36c] sm:$0xff]
    %v218 = vld [vmem:[#allocation5 + $0x374] sm:$0xf]
    %v219 = vld [vmem:[#allocation5 + $0x378] sm:$0xff]
    %v220 = vld [vmem:[#allocation5 + $0x380] sm:$0xf]
    %v221 = vld [vmem:[#allocation5 + $0x384] sm:$0xff]
    %v222 = vld [vmem:[#allocation5 + $0x38c] sm:$0xf]
    %v223 = vld [vmem:[#allocation5 + $0x390] sm:$0xff]
    %v224 = vld [vmem:[#allocation5 + $0x398] sm:$0xf]
    %v225 = vld [vmem:[#allocation5 + $0x39c] sm:$0xff]
    %v226 = vld [vmem:[#allocation5 + $0x3a4] sm:$0xf]
    %v227 = vld [vmem:[#allocation5 + $0x3a8] sm:$0xff]
    %v228 = vld [vmem:[#allocation5 + $0x3b0] sm:$0xf]
    %v229 = vld [vmem:[#allocation5 + $0x3b4] sm:$0xff]
    %v230 = vld [vmem:[#allocation5 + $0x3bc] sm:$0xf]
    %v231 = vld [vmem:[#allocation5 + $0x3c0] sm:$0xff]
    %v232 = vld [vmem:[#allocation5 + $0x3c8] sm:$0xf]
    %v233 = vld [vmem:[#allocation5 + $0x3cc] sm:$0xff]
    %v234 = vld [vmem:[#allocation5 + $0x3d4] sm:$0xf]
    %v235 = vld [vmem:[#allocation5 + $0x3d8] sm:$0xff]
    %v236 = vld [vmem:[#allocation5 + $0x3e0] sm:$0xf]
    %v237 = vld [vmem:[#allocation5 + $0x3e4] sm:$0xff]
    %v238 = vld [vmem:[#allocation5 + $0x3ec] sm:$0xf]
    %v239 = vld [vmem:[#allocation5 + $0x3f0] sm:$0xff]
    %v240 = vld [vmem:[#allocation5 + $0x3f8] sm:$0xf]
    %v241 = vld [vmem:[#allocation5 + $0x3fc] sm:$0xff]
    %v242 = vld [vmem:[#allocation5 + $0x404] sm:$0xf]
    %v243 = vld [vmem:[#allocation5 + $0x408] sm:$0xff]
    %v244 = vld [vmem:[#allocation5 + $0x410] sm:$0xf]
    %v245 = vld [vmem:[#allocation5 + $0x414] sm:$0xff]
    %v246 = vld [vmem:[#allocation5 + $0x41c] sm:$0xf]
    %v247 = vld [vmem:[#allocation5 + $0x420] sm:$0xff]
    %v248 = vld [vmem:[#allocation5 + $0x428] sm:$0xf]
    %v249 = vld [vmem:[#allocation5 + $0x42c] sm:$0xff]
    %v250 = vld [vmem:[#allocation5 + $0x434] sm:$0xf]
    %v251 = vld [vmem:[#allocation5 + $0x438] sm:$0xff]
    %v252 = vld [vmem:[#allocation5 + $0x440] sm:$0xf]
    %v253 = vld [vmem:[#allocation5 + $0x444] sm:$0xff]
    %v254 = vld [vmem:[#allocation5 + $0x44c] sm:$0xf]
    %v255 = vld [vmem:[#allocation5 + $0x450] sm:$0xff]
    %v256 = vld [vmem:[#allocation5 + $0x458] sm:$0xf]
    %v257 = vld [vmem:[#allocation5 + $0x45c] sm:$0xff]
    %v258 = vld [vmem:[#allocation5 + $0x464] sm:$0xf]
    %v259 = vld [vmem:[#allocation5 + $0x468] sm:$0xff]
    %v260 = vld [vmem:[#allocation5 + $0x470] sm:$0xf]
    %v261 = vld [vmem:[#allocation5 + $0x474] sm:$0xff]
    %v262 = vld [vmem:[#allocation5 + $0x47c] sm:$0xf]
    %v263 = vld [vmem:[#allocation5 + $0x480] sm:$0xff]
    %v264 = vld [vmem:[#allocation5 + $0x488] sm:$0xf]
    %v265 = vld [vmem:[#allocation5 + $0x48c] sm:$0xff]
    %v266 = vld [vmem:[#allocation5 + $0x494] sm:$0xf]
    %v267 = vld [vmem:[#allocation5 + $0x498] sm:$0xff]
    %v268 = vld [vmem:[#allocation5 + $0x4a0] sm:$0xf]
    %v269 = vld [vmem:[#allocation5 + $0x4a4] sm:$0xff]
    %v270 = vld [vmem:[#allocation5 + $0x4ac] sm:$0xf]
    %v271 = vld [vmem:[#allocation5 + $0x4b0] sm:$0xff]
    %v272 = vld [vmem:[#allocation5 + $0x4b8] sm:$0xf]
    %v273 = vld [vmem:[#allocation5 + $0x4bc] sm:$0xff]
    %v274 = vld [vmem:[#allocation5 + $0x4c4] sm:$0xf]
    %v275 = vld [vmem:[#allocation5 + $0x4c8] sm:$0xff]
    %v276 = vld [vmem:[#allocation5 + $0x4d0] sm:$0xf]
    %v277 = vld [vmem:[#allocation5 + $0x4d4] sm:$0xff]
    %v278 = vld [vmem:[#allocation5 + $0x4dc] sm:$0xf]
    %v279 = vld [vmem:[#allocation5 + $0x4e0] sm:$0xff]
    %v280 = vld [vmem:[#allocation5 + $0x4e8] sm:$0xf]
    %v281 = vld [vmem:[#allocation5 + $0x4ec] sm:$0xff]
    %v282 = vld [vmem:[#allocation5 + $0x4f4] sm:$0xf]
    %v283 = vld [vmem:[#allocation5 + $0x4f8] sm:$0xff]
    %v284 = vld [vmem:[#allocation5 + $0x500] sm:$0xf]
    %v285 = vld [vmem:[#allocation5 + $0x504] sm:$0xff]
    %v286 = vld [vmem:[#allocation5 + $0x50c] sm:$0xf]
    %v287 = vld [vmem:[#allocation5 + $0x510] sm:$0xff]
    %v288 = vld [vmem:[#allocation5 + $0x518] sm:$0xf]
    %v289 = vld [vmem:[#allocation5 + $0x51c] sm:$0xff]
    %v290 = vld [vmem:[#allocation5 + $0x524] sm:$0xf]
    %v291 = vld [vmem:[#allocation5 + $0x528] sm:$0xff]
    %v292 = vld [vmem:[#allocation5 + $0x530] sm:$0xf]
    %v293 = vld [vmem:[#allocation5 + $0x534] sm:$0xff]
    %v294 = vld [vmem:[#allocation5 + $0x53c] sm:$0xf]
    %v295 = vld [vmem:[#allocation5 + $0x540] sm:$0xff]
    %v296 = vld [vmem:[#allocation5 + $0x548] sm:$0xf]
    %v297 = vld [vmem:[#allocation5 + $0x54c] sm:$0xff]
    %v298 = vld [vmem:[#allocation5 + $0x554] sm:$0xf]
    %v299 = vld [vmem:[#allocation5 + $0x558] sm:$0xff]
    %v300 = vld [vmem:[#allocation5 + $0x560] sm:$0xf]
    %v301 = vld [vmem:[#allocation5 + $0x564] sm:$0xff]
    %v302 = vld [vmem:[#allocation5 + $0x56c] sm:$0xf]
    %v303 = vld [vmem:[#allocation5 + $0x570] sm:$0xff]
    %v304 = vld [vmem:[#allocation5 + $0x578] sm:$0xf]
    %v305 = vld [vmem:[#allocation5 + $0x57c] sm:$0xff]
    %v306 = vld [vmem:[#allocation5 + $0x584] sm:$0xf]
    %v307 = vld [vmem:[#allocation5 + $0x588] sm:$0xff]
    %v308 = vld [vmem:[#allocation5 + $0x590] sm:$0xf]
    %v309 = vld [vmem:[#allocation5 + $0x594] sm:$0xff]
    %v310 = vld [vmem:[#allocation5 + $0x59c] sm:$0xf]
    %v311 = vld [vmem:[#allocation5 + $0x5a0] sm:$0xff]
    %v312 = vld [vmem:[#allocation5 + $0x5a8] sm:$0xf]
    %v313 = vld [vmem:[#allocation5 + $0x5ac] sm:$0xff]
    %v314 = vld [vmem:[#allocation5 + $0x5b4] sm:$0xf]
    %v315 = vld [vmem:[#allocation5 + $0x5b8] sm:$0xff]
    %v316 = vld [vmem:[#allocation5 + $0x5c0] sm:$0xf]
    %v317 = vld [vmem:[#allocation5 + $0x5c4] sm:$0xff]
    %v318 = vld [vmem:[#allocation5 + $0x5cc] sm:$0xf]
    %v319 = vld [vmem:[#allocation5 + $0x5d0] sm:$0xff]
    %v320 = vld [vmem:[#allocation5 + $0x5d8] sm:$0xf]
    %v321 = vld [vmem:[#allocation5 + $0x5dc] sm:$0xff]
    %v322 = vld [vmem:[#allocation5 + $0x5e4] sm:$0xf]
    %v323 = vld [vmem:[#allocation5 + $0x5e8] sm:$0xff]
    %v324 = vld [vmem:[#allocation5 + $0x5f0] sm:$0xf]
    %v325 = vld [vmem:[#allocation5 + $0x5f4] sm:$0xff]
    %v326 = vld [vmem:[#allocation5 + $0x5fc] sm:$0xf]
    %v327 = vld [vmem:[%s2] sm:$0x7]
    %v329 = vlaneseq
    %v330 = vshrl.u32 %v329, 7
    %v331 = vsub.s32 0, %v330
    %v332 = vrot.slane %v327, %v331
    %v333 = vlaneseq
    %v334 = vshrl.u32 %v333, 7
    %v335 = vsub.s32 1, %v334
    %v336 = vrot.slane %v327, %v335
    %v337 = vlaneseq
    %v338 = vshrl.u32 %v337, 7
    %v339 = vsub.s32 2, %v338
    %v340 = vrot.slane %v327, %v339
    %v352 = vunpack.c.l.b16 %v63
    %v353 = vunpack.c.h.b16 %v63
    %v354 = vunpack.c.l.b16 %v64
    %v355 = vunpack.c.h.b16 %v64
    %v356 = vunpack.c.l.b16 %v65
    %v357 = vunpack.c.h.b16 %v65
    %v358 = vunpack.c.l.b16 %v66
    %v359 = vunpack.c.h.b16 %v66
    %v360 = vunpack.c.l.b16 %v67
    %v361 = vunpack.c.h.b16 %v67
    %v362 = vunpack.c.l.b16 %v68
    %v363 = vunpack.c.h.b16 %v68
    %v364 = vunpack.c.l.b16 %v69
    %v365 = vunpack.c.h.b16 %v69
    %v366 = vunpack.c.l.b16 %v70
    %v367 = vunpack.c.h.b16 %v70
    %v368 = vpack.c.b16 %v360, %v352
    %v369 = vpack.c.b16 %v361, %v353
    %v370 = vpack.c.b16 %v362, %v354
    %v371 = vpack.c.b16 %v363, %v355
    %v372 = vpack.c.b16 %v364, %v356
    %v373 = vpack.c.b16 %v365, %v357
    %v374 = vpack.c.b16 %v366, %v358
    %v375 = vpack.c.b16 %v367, %v359
    %v640 = vunpack.c.l.b16 %v71
    %v641 = vunpack.c.h.b16 %v71
    %v642 = vunpack.c.l.b16 %v72
    %v643 = vunpack.c.l.b16 %v73
    %v644 = vunpack.c.h.b16 %v73
    %v645 = vunpack.c.l.b16 %v74
    %v646 = vunpack.c.l.b16 %v75
    %v647 = vunpack.c.h.b16 %v75
    %v648 = vunpack.c.l.b16 %v76
    %v649 = vunpack.c.l.b16 %v77
    %v650 = vunpack.c.h.b16 %v77
    %v651 = vunpack.c.l.b16 %v78
    %v652 = vunpack.c.l.b16 %v79
    %v653 = vunpack.c.h.b16 %v79
    %v654 = vunpack.c.l.b16 %v80
    %v655 = vunpack.c.l.b16 %v81
    %v656 = vunpack.c.h.b16 %v81
    %v657 = vunpack.c.l.b16 %v82
    %v658 = vunpack.c.l.b16 %v83
    %v659 = vunpack.c.h.b16 %v83
    %v660 = vunpack.c.l.b16 %v84
    %v661 = vunpack.c.l.b16 %v85
    %v662 = vunpack.c.h.b16 %v85
    %v663 = vunpack.c.l.b16 %v86
    %v664 = vunpack.c.l.b16 %v87
    %v665 = vunpack.c.h.b16 %v87
    %v666 = vunpack.c.l.b16 %v88
    %v667 = vunpack.c.l.b16 %v89
    %v668 = vunpack.c.h.b16 %v89
    %v669 = vunpack.c.l.b16 %v90
    %v670 = vunpack.c.l.b16 %v91
    %v671 = vunpack.c.h.b16 %v91
    %v672 = vunpack.c.l.b16 %v92
    %v673 = vunpack.c.l.b16 %v93
    %v674 = vunpack.c.h.b16 %v93
    %v675 = vunpack.c.l.b16 %v94
    %v676 = vunpack.c.l.b16 %v95
    %v677 = vunpack.c.h.b16 %v95
    %v678 = vunpack.c.l.b16 %v96
    %v679 = vunpack.c.l.b16 %v97
    %v680 = vunpack.c.h.b16 %v97
    %v681 = vunpack.c.l.b16 %v98
    %v682 = vunpack.c.l.b16 %v99
    %v683 = vunpack.c.h.b16 %v99
    %v684 = vunpack.c.l.b16 %v100
    %v685 = vunpack.c.l.b16 %v101
    %v686 = vunpack.c.h.b16 %v101
    %v687 = vunpack.c.l.b16 %v102
    %v688 = vunpack.c.l.b16 %v103
    %v689 = vunpack.c.h.b16 %v103
    %v690 = vunpack.c.l.b16 %v104
    %v691 = vunpack.c.l.b16 %v105
    %v692 = vunpack.c.h.b16 %v105
    %v693 = vunpack.c.l.b16 %v106
    %v694 = vunpack.c.l.b16 %v107
    %v695 = vunpack.c.h.b16 %v107
    %v696 = vunpack.c.l.b16 %v108
    %v697 = vunpack.c.l.b16 %v109
    %v698 = vunpack.c.h.b16 %v109
    %v699 = vunpack.c.l.b16 %v110
    %v700 = vunpack.c.l.b16 %v111
    %v701 = vunpack.c.h.b16 %v111
    %v702 = vunpack.c.l.b16 %v112
    %v703 = vunpack.c.l.b16 %v113
    %v704 = vunpack.c.h.b16 %v113
    %v705 = vunpack.c.l.b16 %v114
    %v706 = vunpack.c.l.b16 %v115
    %v707 = vunpack.c.h.b16 %v115
    %v708 = vunpack.c.l.b16 %v116
    %v709 = vunpack.c.l.b16 %v117
    %v710 = vunpack.c.h.b16 %v117
    %v711 = vunpack.c.l.b16 %v118
    %v712 = vunpack.c.l.b16 %v119
    %v713 = vunpack.c.h.b16 %v119
    %v714 = vunpack.c.l.b16 %v120
    %v715 = vunpack.c.l.b16 %v121
    %v716 = vunpack.c.h.b16 %v121
    %v717 = vunpack.c.l.b16 %v122
    %v718 = vunpack.c.l.b16 %v123
    %v719 = vunpack.c.h.b16 %v123
    %v720 = vunpack.c.l.b16 %v124
    %v721 = vunpack.c.l.b16 %v125
    %v722 = vunpack.c.h.b16 %v125
    %v723 = vunpack.c.l.b16 %v126
    %v724 = vunpack.c.l.b16 %v127
    %v725 = vunpack.c.h.b16 %v127
    %v726 = vunpack.c.l.b16 %v128
    %v727 = vunpack.c.l.b16 %v129
    %v728 = vunpack.c.h.b16 %v129
    %v729 = vunpack.c.l.b16 %v130
    %v730 = vunpack.c.l.b16 %v131
    %v731 = vunpack.c.h.b16 %v131
    %v732 = vunpack.c.l.b16 %v132
    %v733 = vunpack.c.l.b16 %v133
    %v734 = vunpack.c.h.b16 %v133
    %v735 = vunpack.c.l.b16 %v134
    %v736 = vunpack.c.l.b16 %v135
    %v737 = vunpack.c.h.b16 %v135
    %v738 = vunpack.c.l.b16 %v136
    %v739 = vunpack.c.l.b16 %v137
    %v740 = vunpack.c.h.b16 %v137
    %v741 = vunpack.c.l.b16 %v138
    %v742 = vunpack.c.l.b16 %v139
    %v743 = vunpack.c.h.b16 %v139
    %v744 = vunpack.c.l.b16 %v140
    %v745 = vunpack.c.l.b16 %v141
    %v746 = vunpack.c.h.b16 %v141
    %v747 = vunpack.c.l.b16 %v142
    %v748 = vunpack.c.l.b16 %v143
    %v749 = vunpack.c.h.b16 %v143
    %v750 = vunpack.c.l.b16 %v144
    %v751 = vunpack.c.l.b16 %v145
    %v752 = vunpack.c.h.b16 %v145
    %v753 = vunpack.c.l.b16 %v146
    %v754 = vunpack.c.l.b16 %v147
    %v755 = vunpack.c.h.b16 %v147
    %v756 = vunpack.c.l.b16 %v148
    %v757 = vunpack.c.l.b16 %v149
    %v758 = vunpack.c.h.b16 %v149
    %v759 = vunpack.c.l.b16 %v150
    %v760 = vunpack.c.l.b16 %v151
    %v761 = vunpack.c.h.b16 %v151
    %v762 = vunpack.c.l.b16 %v152
    %v763 = vunpack.c.l.b16 %v153
    %v764 = vunpack.c.h.b16 %v153
    %v765 = vunpack.c.l.b16 %v154
    %v766 = vunpack.c.l.b16 %v155
    %v767 = vunpack.c.h.b16 %v155
    %v768 = vunpack.c.l.b16 %v156
    %v769 = vunpack.c.l.b16 %v157
    %v770 = vunpack.c.h.b16 %v157
    %v771 = vunpack.c.l.b16 %v158
    %v772 = vunpack.c.l.b16 %v159
    %v773 = vunpack.c.h.b16 %v159
    %v774 = vunpack.c.l.b16 %v160
    %v775 = vunpack.c.l.b16 %v161
    %v776 = vunpack.c.h.b16 %v161
    %v777 = vunpack.c.l.b16 %v162
    %v778 = vunpack.c.l.b16 %v163
    %v779 = vunpack.c.h.b16 %v163
    %v780 = vunpack.c.l.b16 %v164
    %v781 = vunpack.c.l.b16 %v165
    %v782 = vunpack.c.h.b16 %v165
    %v783 = vunpack.c.l.b16 %v166
    %v784 = vunpack.c.l.b16 %v167
    %v785 = vunpack.c.h.b16 %v167
    %v786 = vunpack.c.l.b16 %v168
    %v787 = vunpack.c.l.b16 %v169
    %v788 = vunpack.c.h.b16 %v169
    %v789 = vunpack.c.l.b16 %v170
    %v790 = vunpack.c.l.b16 %v171
    %v791 = vunpack.c.h.b16 %v171
    %v792 = vunpack.c.l.b16 %v172
    %v793 = vunpack.c.l.b16 %v173
    %v794 = vunpack.c.h.b16 %v173
    %v795 = vunpack.c.l.b16 %v174
    %v796 = vunpack.c.l.b16 %v175
    %v797 = vunpack.c.h.b16 %v175
    %v798 = vunpack.c.l.b16 %v176
    %v799 = vunpack.c.l.b16 %v177
    %v800 = vunpack.c.h.b16 %v177
    %v801 = vunpack.c.l.b16 %v178
    %v802 = vunpack.c.l.b16 %v179
    %v803 = vunpack.c.h.b16 %v179
    %v804 = vunpack.c.l.b16 %v180
    %v805 = vunpack.c.l.b16 %v181
    %v806 = vunpack.c.h.b16 %v181
    %v807 = vunpack.c.l.b16 %v182
    %v808 = vunpack.c.l.b16 %v183
    %v809 = vunpack.c.h.b16 %v183
    %v810 = vunpack.c.l.b16 %v184
    %v811 = vunpack.c.l.b16 %v185
    %v812 = vunpack.c.h.b16 %v185
    %v813 = vunpack.c.l.b16 %v186
    %v814 = vunpack.c.l.b16 %v187
    %v815 = vunpack.c.h.b16 %v187
    %v816 = vunpack.c.l.b16 %v188
    %v817 = vunpack.c.l.b16 %v189
    %v818 = vunpack.c.h.b16 %v189
    %v819 = vunpack.c.l.b16 %v190
    %v820 = vunpack.c.l.b16 %v191
    %v821 = vunpack.c.h.b16 %v191
    %v822 = vunpack.c.l.b16 %v192
    %v823 = vunpack.c.l.b16 %v193
    %v824 = vunpack.c.h.b16 %v193
    %v825 = vunpack.c.l.b16 %v194
    %v826 = vunpack.c.l.b16 %v195
    %v827 = vunpack.c.h.b16 %v195
    %v828 = vunpack.c.l.b16 %v196
    %v829 = vunpack.c.l.b16 %v197
    %v830 = vunpack.c.h.b16 %v197
    %v831 = vunpack.c.l.b16 %v198
    %v832 = vunpack.c.l.b16 %v199
    %v833 = vunpack.c.h.b16 %v199
    %v834 = vunpack.c.l.b16 %v200
    %v835 = vunpack.c.l.b16 %v201
    %v836 = vunpack.c.h.b16 %v201
    %v837 = vunpack.c.l.b16 %v202
    %v838 = vunpack.c.l.b16 %v203
    %v839 = vunpack.c.h.b16 %v203
    %v840 = vunpack.c.l.b16 %v204
    %v841 = vunpack.c.l.b16 %v205
    %v842 = vunpack.c.h.b16 %v205
    %v843 = vunpack.c.l.b16 %v206
    %v844 = vunpack.c.l.b16 %v207
    %v845 = vunpack.c.h.b16 %v207
    %v846 = vunpack.c.l.b16 %v208
    %v847 = vunpack.c.l.b16 %v209
    %v848 = vunpack.c.h.b16 %v209
    %v849 = vunpack.c.l.b16 %v210
    %v850 = vunpack.c.l.b16 %v211
    %v851 = vunpack.c.h.b16 %v211
    %v852 = vunpack.c.l.b16 %v212
    %v853 = vunpack.c.l.b16 %v213
    %v854 = vunpack.c.h.b16 %v213
    %v855 = vunpack.c.l.b16 %v214
    %v856 = vunpack.c.l.b16 %v215
    %v857 = vunpack.c.h.b16 %v215
    %v858 = vunpack.c.l.b16 %v216
    %v859 = vunpack.c.l.b16 %v217
    %v860 = vunpack.c.h.b16 %v217
    %v861 = vunpack.c.l.b16 %v218
    %v862 = vunpack.c.l.b16 %v219
    %v863 = vunpack.c.h.b16 %v219
    %v864 = vunpack.c.l.b16 %v220
    %v865 = vunpack.c.l.b16 %v221
    %v866 = vunpack.c.h.b16 %v221
    %v867 = vunpack.c.l.b16 %v222
    %v868 = vunpack.c.l.b16 %v223
    %v869 = vunpack.c.h.b16 %v223
    %v870 = vunpack.c.l.b16 %v224
    %v871 = vunpack.c.l.b16 %v225
    %v872 = vunpack.c.h.b16 %v225
    %v873 = vunpack.c.l.b16 %v226
    %v874 = vunpack.c.l.b16 %v227
    %v875 = vunpack.c.h.b16 %v227
    %v876 = vunpack.c.l.b16 %v228
    %v877 = vunpack.c.l.b16 %v229
    %v878 = vunpack.c.h.b16 %v229
    %v879 = vunpack.c.l.b16 %v230
    %v880 = vunpack.c.l.b16 %v231
    %v881 = vunpack.c.h.b16 %v231
    %v882 = vunpack.c.l.b16 %v232
    %v883 = vunpack.c.l.b16 %v233
    %v884 = vunpack.c.h.b16 %v233
    %v885 = vunpack.c.l.b16 %v234
    %v886 = vunpack.c.l.b16 %v235
    %v887 = vunpack.c.h.b16 %v235
    %v888 = vunpack.c.l.b16 %v236
    %v889 = vunpack.c.l.b16 %v237
    %v890 = vunpack.c.h.b16 %v237
    %v891 = vunpack.c.l.b16 %v238
    %v892 = vunpack.c.l.b16 %v239
    %v893 = vunpack.c.h.b16 %v239
    %v894 = vunpack.c.l.b16 %v240
    %v895 = vunpack.c.l.b16 %v241
    %v896 = vunpack.c.h.b16 %v241
    %v897 = vunpack.c.l.b16 %v242
    %v898 = vunpack.c.l.b16 %v243
    %v899 = vunpack.c.h.b16 %v243
    %v900 = vunpack.c.l.b16 %v244
    %v901 = vunpack.c.l.b16 %v245
    %v902 = vunpack.c.h.b16 %v245
    %v903 = vunpack.c.l.b16 %v246
    %v904 = vunpack.c.l.b16 %v247
    %v905 = vunpack.c.h.b16 %v247
    %v906 = vunpack.c.l.b16 %v248
    %v907 = vunpack.c.l.b16 %v249
    %v908 = vunpack.c.h.b16 %v249
    %v909 = vunpack.c.l.b16 %v250
    %v910 = vunpack.c.l.b16 %v251
    %v911 = vunpack.c.h.b16 %v251
    %v912 = vunpack.c.l.b16 %v252
    %v913 = vunpack.c.l.b16 %v253
    %v914 = vunpack.c.h.b16 %v253
    %v915 = vunpack.c.l.b16 %v254
    %v916 = vunpack.c.l.b16 %v255
    %v917 = vunpack.c.h.b16 %v255
    %v918 = vunpack.c.l.b16 %v256
    %v919 = vunpack.c.l.b16 %v257
    %v920 = vunpack.c.h.b16 %v257
    %v921 = vunpack.c.l.b16 %v258
    %v922 = vunpack.c.l.b16 %v259
    %v923 = vunpack.c.h.b16 %v259
    %v924 = vunpack.c.l.b16 %v260
    %v925 = vunpack.c.l.b16 %v261
    %v926 = vunpack.c.h.b16 %v261
    %v927 = vunpack.c.l.b16 %v262
    %v928 = vunpack.c.l.b16 %v263
    %v929 = vunpack.c.h.b16 %v263
    %v930 = vunpack.c.l.b16 %v264
    %v931 = vunpack.c.l.b16 %v265
    %v932 = vunpack.c.h.b16 %v265
    %v933 = vunpack.c.l.b16 %v266
    %v934 = vunpack.c.l.b16 %v267
    %v935 = vunpack.c.h.b16 %v267
    %v936 = vunpack.c.l.b16 %v268
    %v937 = vunpack.c.l.b16 %v269
    %v938 = vunpack.c.h.b16 %v269
    %v939 = vunpack.c.l.b16 %v270
    %v940 = vunpack.c.l.b16 %v271
    %v941 = vunpack.c.h.b16 %v271
    %v942 = vunpack.c.l.b16 %v272
    %v943 = vunpack.c.l.b16 %v273
    %v944 = vunpack.c.h.b16 %v273
    %v945 = vunpack.c.l.b16 %v274
    %v946 = vunpack.c.l.b16 %v275
    %v947 = vunpack.c.h.b16 %v275
    %v948 = vunpack.c.l.b16 %v276
    %v949 = vunpack.c.l.b16 %v277
    %v950 = vunpack.c.h.b16 %v277
    %v951 = vunpack.c.l.b16 %v278
    %v952 = vunpack.c.l.b16 %v279
    %v953 = vunpack.c.h.b16 %v279
    %v954 = vunpack.c.l.b16 %v280
    %v955 = vunpack.c.l.b16 %v281
    %v956 = vunpack.c.h.b16 %v281
    %v957 = vunpack.c.l.b16 %v282
    %v958 = vunpack.c.l.b16 %v283
    %v959 = vunpack.c.h.b16 %v283
    %v960 = vunpack.c.l.b16 %v284
    %v961 = vunpack.c.l.b16 %v285
    %v962 = vunpack.c.h.b16 %v285
    %v963 = vunpack.c.l.b16 %v286
    %v964 = vunpack.c.l.b16 %v287
    %v965 = vunpack.c.h.b16 %v287
    %v966 = vunpack.c.l.b16 %v288
    %v967 = vunpack.c.l.b16 %v289
    %v968 = vunpack.c.h.b16 %v289
    %v969 = vunpack.c.l.b16 %v290
    %v970 = vunpack.c.l.b16 %v291
    %v971 = vunpack.c.h.b16 %v291
    %v972 = vunpack.c.l.b16 %v292
    %v973 = vunpack.c.l.b16 %v293
    %v974 = vunpack.c.h.b16 %v293
    %v975 = vunpack.c.l.b16 %v294
    %v976 = vunpack.c.l.b16 %v295
    %v977 = vunpack.c.h.b16 %v295
    %v978 = vunpack.c.l.b16 %v296
    %v979 = vunpack.c.l.b16 %v297
    %v980 = vunpack.c.h.b16 %v297
    %v981 = vunpack.c.l.b16 %v298
    %v982 = vunpack.c.l.b16 %v299
    %v983 = vunpack.c.h.b16 %v299
    %v984 = vunpack.c.l.b16 %v300
    %v985 = vunpack.c.l.b16 %v301
    %v986 = vunpack.c.h.b16 %v301
    %v987 = vunpack.c.l.b16 %v302
    %v988 = vunpack.c.l.b16 %v303
    %v989 = vunpack.c.h.b16 %v303
    %v990 = vunpack.c.l.b16 %v304
    %v991 = vunpack.c.l.b16 %v305
    %v992 = vunpack.c.h.b16 %v305
    %v993 = vunpack.c.l.b16 %v306
    %v994 = vunpack.c.l.b16 %v307
    %v995 = vunpack.c.h.b16 %v307
    %v996 = vunpack.c.l.b16 %v308
    %v997 = vunpack.c.l.b16 %v309
    %v998 = vunpack.c.h.b16 %v309
    %v999 = vunpack.c.l.b16 %v310
    %v1000 = vunpack.c.l.b16 %v311
    %v1001 = vunpack.c.h.b16 %v311
    %v1002 = vunpack.c.l.b16 %v312
    %v1003 = vunpack.c.l.b16 %v313
    %v1004 = vunpack.c.h.b16 %v313
    %v1005 = vunpack.c.l.b16 %v314
    %v1006 = vunpack.c.l.b16 %v315
    %v1007 = vunpack.c.h.b16 %v315
    %v1008 = vunpack.c.l.b16 %v316
    %v1009 = vunpack.c.l.b16 %v317
    %v1010 = vunpack.c.h.b16 %v317
    %v1011 = vunpack.c.l.b16 %v318
    %v1012 = vunpack.c.l.b16 %v319
    %v1013 = vunpack.c.h.b16 %v319
    %v1014 = vunpack.c.l.b16 %v320
    %v1015 = vunpack.c.l.b16 %v321
    %v1016 = vunpack.c.h.b16 %v321
    %v1017 = vunpack.c.l.b16 %v322
    %v1018 = vunpack.c.l.b16 %v323
    %v1019 = vunpack.c.h.b16 %v323
    %v1020 = vunpack.c.l.b16 %v324
    %v1021 = vunpack.c.l.b16 %v325
    %v1022 = vunpack.c.h.b16 %v325
    %v1023 = vunpack.c.l.b16 %v326
    %v1024 = vpack.c.b16 %v643, %v640
    %v1025 = vpack.c.b16 %v644, %v641
    %v1026 = vpack.c.b16 %v645, %v642
    %v1027 = vpack.c.b16 %v649, %v646
    %v1028 = vpack.c.b16 %v650, %v647
    %v1029 = vpack.c.b16 %v651, %v648
    %v1030 = vpack.c.b16 %v655, %v652
    %v1031 = vpack.c.b16 %v656, %v653
    %v1032 = vpack.c.b16 %v657, %v654
    %v1033 = vpack.c.b16 %v661, %v658
    %v1034 = vpack.c.b16 %v662, %v659
    %v1035 = vpack.c.b16 %v663, %v660
    %v1036 = vpack.c.b16 %v667, %v664
    %v1037 = vpack.c.b16 %v668, %v665
    %v1038 = vpack.c.b16 %v669, %v666
    %v1039 = vpack.c.b16 %v673, %v670
    %v1040 = vpack.c.b16 %v674, %v671
    %v1041 = vpack.c.b16 %v675, %v672
    %v1042 = vpack.c.b16 %v679, %v676
    %v1043 = vpack.c.b16 %v680, %v677
    %v1044 = vpack.c.b16 %v681, %v678
    %v1045 = vpack.c.b16 %v685, %v682
    %v1046 = vpack.c.b16 %v686, %v683
    %v1047 = vpack.c.b16 %v687, %v684
    %v1048 = vpack.c.b16 %v691, %v688
    %v1049 = vpack.c.b16 %v692, %v689
    %v1050 = vpack.c.b16 %v693, %v690
    %v1051 = vpack.c.b16 %v697, %v694
    %v1052 = vpack.c.b16 %v698, %v695
    %v1053 = vpack.c.b16 %v699, %v696
    %v1054 = vpack.c.b16 %v703, %v700
    %v1055 = vpack.c.b16 %v704, %v701
    %v1056 = vpack.c.b16 %v705, %v702
    %v1057 = vpack.c.b16 %v709, %v706
    %v1058 = vpack.c.b16 %v710, %v707
    %v1059 = vpack.c.b16 %v711, %v708
    %v1060 = vpack.c.b16 %v715, %v712
    %v1061 = vpack.c.b16 %v716, %v713
    %v1062 = vpack.c.b16 %v717, %v714
    %v1063 = vpack.c.b16 %v721, %v718
    %v1064 = vpack.c.b16 %v722, %v719
    %v1065 = vpack.c.b16 %v723, %v720
    %v1066 = vpack.c.b16 %v727, %v724
    %v1067 = vpack.c.b16 %v728, %v725
    %v1068 = vpack.c.b16 %v729, %v726
    %v1069 = vpack.c.b16 %v733, %v730
    %v1070 = vpack.c.b16 %v734, %v731
    %v1071 = vpack.c.b16 %v735, %v732
    %v1072 = vpack.c.b16 %v739, %v736
    %v1073 = vpack.c.b16 %v740, %v737
    %v1074 = vpack.c.b16 %v741, %v738
    %v1075 = vpack.c.b16 %v745, %v742
    %v1076 = vpack.c.b16 %v746, %v743
    %v1077 = vpack.c.b16 %v747, %v744
    %v1078 = vpack.c.b16 %v751, %v748
    %v1079 = vpack.c.b16 %v752, %v749
    %v1080 = vpack.c.b16 %v753, %v750
    %v1081 = vpack.c.b16 %v757, %v754
    %v1082 = vpack.c.b16 %v758, %v755
    %v1083 = vpack.c.b16 %v759, %v756
    %v1084 = vpack.c.b16 %v763, %v760
    %v1085 = vpack.c.b16 %v764, %v761
    %v1086 = vpack.c.b16 %v765, %v762
    %v1087 = vpack.c.b16 %v769, %v766
    %v1088 = vpack.c.b16 %v770, %v767
    %v1089 = vpack.c.b16 %v771, %v768
    %v1090 = vpack.c.b16 %v775, %v772
    %v1091 = vpack.c.b16 %v776, %v773
    %v1092 = vpack.c.b16 %v777, %v774
    %v1093 = vpack.c.b16 %v781, %v778
    %v1094 = vpack.c.b16 %v782, %v779
    %v1095 = vpack.c.b16 %v783, %v780
    %v1096 = vpack.c.b16 %v787, %v784
    %v1097 = vpack.c.b16 %v788, %v785
    %v1098 = vpack.c.b16 %v789, %v786
    %v1099 = vpack.c.b16 %v793, %v790
    %v1100 = vpack.c.b16 %v794, %v791
    %v1101 = vpack.c.b16 %v795, %v792
    %v1102 = vpack.c.b16 %v799, %v796
    %v1103 = vpack.c.b16 %v800, %v797
    %v1104 = vpack.c.b16 %v801, %v798
    %v1105 = vpack.c.b16 %v805, %v802
    %v1106 = vpack.c.b16 %v806, %v803
    %v1107 = vpack.c.b16 %v807, %v804
    %v1108 = vpack.c.b16 %v811, %v808
    %v1109 = vpack.c.b16 %v812, %v809
    %v1110 = vpack.c.b16 %v813, %v810
    %v1111 = vpack.c.b16 %v817, %v814
    %v1112 = vpack.c.b16 %v818, %v815
    %v1113 = vpack.c.b16 %v819, %v816
    %v1114 = vpack.c.b16 %v823, %v820
    %v1115 = vpack.c.b16 %v824, %v821
    %v1116 = vpack.c.b16 %v825, %v822
    %v1117 = vpack.c.b16 %v829, %v826
    %v1118 = vpack.c.b16 %v830, %v827
    %v1119 = vpack.c.b16 %v831, %v828
    %v1120 = vpack.c.b16 %v835, %v832
    %v1121 = vpack.c.b16 %v836, %v833
    %v1122 = vpack.c.b16 %v837, %v834
    %v1123 = vpack.c.b16 %v841, %v838
    %v1124 = vpack.c.b16 %v842, %v839
    %v1125 = vpack.c.b16 %v843, %v840
    %v1126 = vpack.c.b16 %v847, %v844
    %v1127 = vpack.c.b16 %v848, %v845
    %v1128 = vpack.c.b16 %v849, %v846
    %v1129 = vpack.c.b16 %v853, %v850
    %v1130 = vpack.c.b16 %v854, %v851
    %v1131 = vpack.c.b16 %v855, %v852
    %v1132 = vpack.c.b16 %v859, %v856
    %v1133 = vpack.c.b16 %v860, %v857
    %v1134 = vpack.c.b16 %v861, %v858
    %v1135 = vpack.c.b16 %v865, %v862
    %v1136 = vpack.c.b16 %v866, %v863
    %v1137 = vpack.c.b16 %v867, %v864
    %v1138 = vpack.c.b16 %v871, %v868
    %v1139 = vpack.c.b16 %v872, %v869
    %v1140 = vpack.c.b16 %v873, %v870
    %v1141 = vpack.c.b16 %v877, %v874
    %v1142 = vpack.c.b16 %v878, %v875
    %v1143 = vpack.c.b16 %v879, %v876
    %v1144 = vpack.c.b16 %v883, %v880
    %v1145 = vpack.c.b16 %v884, %v881
    %v1146 = vpack.c.b16 %v885, %v882
    %v1147 = vpack.c.b16 %v889, %v886
    %v1148 = vpack.c.b16 %v890, %v887
    %v1149 = vpack.c.b16 %v891, %v888
    %v1150 = vpack.c.b16 %v895, %v892
    %v1151 = vpack.c.b16 %v896, %v893
    %v1152 = vpack.c.b16 %v897, %v894
    %v1153 = vpack.c.b16 %v901, %v898
    %v1154 = vpack.c.b16 %v902, %v899
    %v1155 = vpack.c.b16 %v903, %v900
    %v1156 = vpack.c.b16 %v907, %v904
    %v1157 = vpack.c.b16 %v908, %v905
    %v1158 = vpack.c.b16 %v909, %v906
    %v1159 = vpack.c.b16 %v913, %v910
    %v1160 = vpack.c.b16 %v914, %v911
    %v1161 = vpack.c.b16 %v915, %v912
    %v1162 = vpack.c.b16 %v919, %v916
    %v1163 = vpack.c.b16 %v920, %v917
    %v1164 = vpack.c.b16 %v921, %v918
    %v1165 = vpack.c.b16 %v925, %v922
    %v1166 = vpack.c.b16 %v926, %v923
    %v1167 = vpack.c.b16 %v927, %v924
    %v1168 = vpack.c.b16 %v931, %v928
    %v1169 = vpack.c.b16 %v932, %v929
    %v1170 = vpack.c.b16 %v933, %v930
    %v1171 = vpack.c.b16 %v937, %v934
    %v1172 = vpack.c.b16 %v938, %v935
    %v1173 = vpack.c.b16 %v939, %v936
    %v1174 = vpack.c.b16 %v943, %v940
    %v1175 = vpack.c.b16 %v944, %v941
    %v1176 = vpack.c.b16 %v945, %v942
    %v1177 = vpack.c.b16 %v949, %v946
    %v1178 = vpack.c.b16 %v950, %v947
    %v1179 = vpack.c.b16 %v951, %v948
    %v1180 = vpack.c.b16 %v955, %v952
    %v1181 = vpack.c.b16 %v956, %v953
    %v1182 = vpack.c.b16 %v957, %v954
    %v1183 = vpack.c.b16 %v961, %v958
    %v1184 = vpack.c.b16 %v962, %v959
    %v1185 = vpack.c.b16 %v963, %v960
    %v1186 = vpack.c.b16 %v967, %v964
    %v1187 = vpack.c.b16 %v968, %v965
    %v1188 = vpack.c.b16 %v969, %v966
    %v1189 = vpack.c.b16 %v973, %v970
    %v1190 = vpack.c.b16 %v974, %v971
    %v1191 = vpack.c.b16 %v975, %v972
    %v1192 = vpack.c.b16 %v979, %v976
    %v1193 = vpack.c.b16 %v980, %v977
    %v1194 = vpack.c.b16 %v981, %v978
    %v1195 = vpack.c.b16 %v985, %v982
    %v1196 = vpack.c.b16 %v986, %v983
    %v1197 = vpack.c.b16 %v987, %v984
    %v1198 = vpack.c.b16 %v991, %v988
    %v1199 = vpack.c.b16 %v992, %v989
    %v1200 = vpack.c.b16 %v993, %v990
    %v1201 = vpack.c.b16 %v997, %v994
    %v1202 = vpack.c.b16 %v998, %v995
    %v1203 = vpack.c.b16 %v999, %v996
    %v1204 = vpack.c.b16 %v1003, %v1000
    %v1205 = vpack.c.b16 %v1004, %v1001
    %v1206 = vpack.c.b16 %v1005, %v1002
    %v1207 = vpack.c.b16 %v1009, %v1006
    %v1208 = vpack.c.b16 %v1010, %v1007
    %v1209 = vpack.c.b16 %v1011, %v1008
    %v1210 = vpack.c.b16 %v1015, %v1012
    %v1211 = vpack.c.b16 %v1016, %v1013
    %v1212 = vpack.c.b16 %v1017, %v1014
    %v1213 = vpack.c.b16 %v1021, %v1018
    %v1214 = vpack.c.b16 %v1022, %v1019
    %v1215 = vpack.c.b16 %v1023, %v1020
    %1408 = vmatprep.subr.bf16.mxu0 %v1025
    %1409 = vmatpush1.bf16.msra.mxu0 %v1024
    %1410 = vmatprep.subr.bf16.mxu0 %v1028
    %1411 = vmatpush1.bf16.msra.mxu0 %v1027
    %1412 = vmatprep.subr.bf16.mxu0 %v1031
    %1413 = vmatpush1.bf16.msra.mxu0 %v1030
    %1414 = vmatprep.subr.bf16.mxu0 %v1034
    %1415 = vmatpush1.bf16.msra.mxu0 %v1033
    %1416 = vmatprep.subr.bf16.mxu0 %v1037
    %1417 = vmatpush1.bf16.msra.mxu0 %v1036
    %1418 = vmatprep.subr.bf16.mxu0 %v1040
    %1419 = vmatpush1.bf16.msra.mxu0 %v1039
    %1420 = vmatprep.subr.bf16.mxu0 %v1043
    %1421 = vmatpush1.bf16.msra.mxu0 %v1042
    %1422 = vmatprep.subr.bf16.mxu0 %v1046
    %1423 = vmatpush1.bf16.msra.mxu0 %v1045
    %1424 = vmatprep.subr.bf16.mxu0 %v1049
    %1425 = vmatpush1.bf16.msra.mxu0 %v1048
    %1426 = vmatprep.subr.bf16.mxu0 %v1052
    %1427 = vmatpush1.bf16.msra.mxu0 %v1051
    %1428 = vmatprep.subr.bf16.mxu0 %v1055
    %1429 = vmatpush1.bf16.msra.mxu0 %v1054
    %1430 = vmatprep.subr.bf16.mxu0 %v1058
    %1431 = vmatpush1.bf16.msra.mxu0 %v1057
    %1432 = vmatprep.subr.bf16.mxu0 %v1061
    %1433 = vmatpush1.bf16.msra.mxu0 %v1060
    %1434 = vmatprep.subr.bf16.mxu0 %v1064
    %1435 = vmatpush1.bf16.msra.mxu0 %v1063
    %1436 = vmatprep.subr.bf16.mxu0 %v1067
    %1437 = vmatpush1.bf16.msra.mxu0 %v1066
    %1438 = vmatprep.subr.bf16.mxu0 %v1070
    %1439 = vmatpush1.bf16.msra.mxu0 %v1069
    %1440 = vmatprep.mubr.bf16.mxu0 %v369
    %1441 = vmatmul.mubr.bf16.gmra.mrb[0].mxu0 %v368
    %v1442 = vpop.f32.mrb[0].mxu0
    %v1443 = vadd.f32 %v332, %v1442
    %v1444 = vpop.f32.mrb[0].mxu0
    %v1445 = vadd.f32 %v336, %v1444
    %v1446 = vpop.f32.mrb[0].mxu0
    %v1447 = vadd.f32 %v332, %v1446
    %v1448 = vpop.f32.mrb[0].mxu0
    %v1449 = vadd.f32 %v336, %v1448
    %1450 = vdwg.mxu0
    %1451 = vmatprep.subr.bf16.mxu0 %v1073
    %1452 = vmatpush1.bf16.msra.mxu0 %v1072
    %1453 = vmatprep.subr.bf16.mxu0 %v1076
    %1454 = vmatpush1.bf16.msra.mxu0 %v1075
    %1455 = vmatprep.subr.bf16.mxu0 %v1079
    %1456 = vmatpush1.bf16.msra.mxu0 %v1078
    %1457 = vmatprep.subr.bf16.mxu0 %v1082
    %1458 = vmatpush1.bf16.msra.mxu0 %v1081
    %1459 = vmatprep.subr.bf16.mxu0 %v1085
    %1460 = vmatpush1.bf16.msra.mxu0 %v1084
    %1461 = vmatprep.subr.bf16.mxu0 %v1088
    %1462 = vmatpush1.bf16.msra.mxu0 %v1087
    %1463 = vmatprep.subr.bf16.mxu0 %v1091
    %1464 = vmatpush1.bf16.msra.mxu0 %v1090
    %1465 = vmatprep.subr.bf16.mxu0 %v1094
    %1466 = vmatpush1.bf16.msra.mxu0 %v1093
    %1467 = vmatprep.subr.bf16.mxu0 %v1097
    %1468 = vmatpush1.bf16.msra.mxu0 %v1096
    %1469 = vmatprep.subr.bf16.mxu0 %v1100
    %1470 = vmatpush1.bf16.msra.mxu0 %v1099
    %1471 = vmatprep.subr.bf16.mxu0 %v1103
    %1472 = vmatpush1.bf16.msra.mxu0 %v1102
    %1473 = vmatprep.subr.bf16.mxu0 %v1106
    %1474 = vmatpush1.bf16.msra.mxu0 %v1105
    %1475 = vmatprep.subr.bf16.mxu0 %v1109
    %1476 = vmatpush1.bf16.msra.mxu0 %v1108
    %1477 = vmatprep.subr.bf16.mxu0 %v1112
    %1478 = vmatpush1.bf16.msra.mxu0 %v1111
    %1479 = vmatprep.subr.bf16.mxu0 %v1115
    %1480 = vmatpush1.bf16.msra.mxu0 %v1114
    %1481 = vmatprep.subr.bf16.mxu0 %v1118
    %1482 = vmatpush1.bf16.msra.mxu0 %v1117
    %1483 = vmatprep.mubr.bf16.mxu0 %v371
    %1484 = vmatmul.mubr.bf16.gmra.mrb[0].mxu0 %v370
    %v1485 = vpop.f32.mrb[0].mxu0
    %v1486 = vadd.f32 %v1443, %v1485
    %v1487 = vpop.f32.mrb[0].mxu0
    %v1488 = vadd.f32 %v1445, %v1487
    %v1489 = vpop.f32.mrb[0].mxu0
    %v1490 = vadd.f32 %v1447, %v1489
    %v1491 = vpop.f32.mrb[0].mxu0
    %v1492 = vadd.f32 %v1449, %v1491
    %1493 = vdwg.mxu0
    %1494 = vmatprep.subr.bf16.mxu0 %v1121
    %1495 = vmatpush1.bf16.msra.mxu0 %v1120
    %1496 = vmatprep.subr.bf16.mxu0 %v1124
    %1497 = vmatpush1.bf16.msra.mxu0 %v1123
    %1498 = vmatprep.subr.bf16.mxu0 %v1127
    %1499 = vmatpush1.bf16.msra.mxu0 %v1126
    %1500 = vmatprep.subr.bf16.mxu0 %v1130
    %1501 = vmatpush1.bf16.msra.mxu0 %v1129
    %1502 = vmatprep.subr.bf16.mxu0 %v1133
    %1503 = vmatpush1.bf16.msra.mxu0 %v1132
    %1504 = vmatprep.subr.bf16.mxu0 %v1136
    %1505 = vmatpush1.bf16.msra.mxu0 %v1135
    %1506 = vmatprep.subr.bf16.mxu0 %v1139
    %1507 = vmatpush1.bf16.msra.mxu0 %v1138
    %1508 = vmatprep.subr.bf16.mxu0 %v1142
    %1509 = vmatpush1.bf16.msra.mxu0 %v1141
    %1510 = vmatprep.subr.bf16.mxu0 %v1145
    %1511 = vmatpush1.bf16.msra.mxu0 %v1144
    %1512 = vmatprep.subr.bf16.mxu0 %v1148
    %1513 = vmatpush1.bf16.msra.mxu0 %v1147
    %1514 = vmatprep.subr.bf16.mxu0 %v1151
    %1515 = vmatpush1.bf16.msra.mxu0 %v1150
    %1516 = vmatprep.subr.bf16.mxu0 %v1154
    %1517 = vmatpush1.bf16.msra.mxu0 %v1153
    %1518 = vmatprep.subr.bf16.mxu0 %v1157
    %1519 = vmatpush1.bf16.msra.mxu0 %v1156
    %1520 = vmatprep.subr.bf16.mxu0 %v1160
    %1521 = vmatpush1.bf16.msra.mxu0 %v1159
    %1522 = vmatprep.subr.bf16.mxu0 %v1163
    %1523 = vmatpush1.bf16.msra.mxu0 %v1162
    %1524 = vmatprep.subr.bf16.mxu0 %v1166
    %1525 = vmatpush1.bf16.msra.mxu0 %v1165
    %1526 = vmatprep.mubr.bf16.mxu0 %v373
    %1527 = vmatmul.mubr.bf16.gmra.mrb[0].mxu0 %v372
    %v1528 = vpop.f32.mrb[0].mxu0
    %v1529 = vadd.f32 %v1486, %v1528
    %v1530 = vpop.f32.mrb[0].mxu0
    %v1531 = vadd.f32 %v1488, %v1530
    %v1532 = vpop.f32.mrb[0].mxu0
    %v1533 = vadd.f32 %v1490, %v1532
    %v1534 = vpop.f32.mrb[0].mxu0
    %v1535 = vadd.f32 %v1492, %v1534
    %1536 = vdwg.mxu0
    %1537 = vmatprep.subr.bf16.mxu0 %v1169
    %1538 = vmatpush1.bf16.msra.mxu0 %v1168
    %1539 = vmatprep.subr.bf16.mxu0 %v1172
    %1540 = vmatpush1.bf16.msra.mxu0 %v1171
    %1541 = vmatprep.subr.bf16.mxu0 %v1175
    %1542 = vmatpush1.bf16.msra.mxu0 %v1174
    %1543 = vmatprep.subr.bf16.mxu0 %v1178
    %1544 = vmatpush1.bf16.msra.mxu0 %v1177
    %1545 = vmatprep.subr.bf16.mxu0 %v1181
    %1546 = vmatpush1.bf16.msra.mxu0 %v1180
    %1547 = vmatprep.subr.bf16.mxu0 %v1184
    %1548 = vmatpush1.bf16.msra.mxu0 %v1183
    %1549 = vmatprep.subr.bf16.mxu0 %v1187
    %1550 = vmatpush1.bf16.msra.mxu0 %v1186
    %1551 = vmatprep.subr.bf16.mxu0 %v1190
    %1552 = vmatpush1.bf16.msra.mxu0 %v1189
    %1553 = vmatprep.subr.bf16.mxu0 %v1193
    %1554 = vmatpush1.bf16.msra.mxu0 %v1192
    %1555 = vmatprep.subr.bf16.mxu0 %v1196
    %1556 = vmatpush1.bf16.msra.mxu0 %v1195
    %1557 = vmatprep.subr.bf16.mxu0 %v1199
    %1558 = vmatpush1.bf16.msra.mxu0 %v1198
    %1559 = vmatprep.subr.bf16.mxu0 %v1202
    %1560 = vmatpush1.bf16.msra.mxu0 %v1201
    %1561 = vmatprep.subr.bf16.mxu0 %v1205
    %1562 = vmatpush1.bf16.msra.mxu0 %v1204
    %1563 = vmatprep.subr.bf16.mxu0 %v1208
    %1564 = vmatpush1.bf16.msra.mxu0 %v1207
    %1565 = vmatprep.subr.bf16.mxu0 %v1211
    %1566 = vmatpush1.bf16.msra.mxu0 %v1210
    %1567 = vmatprep.subr.bf16.mxu0 %v1214
    %1568 = vmatpush1.bf16.msra.mxu0 %v1213
    %1569 = vmatprep.mubr.bf16.mxu0 %v375
    %1570 = vmatmul.mubr.bf16.gmra.mrb[0].mxu0 %v374
    %v1571 = vpop.f32.mrb[0].mxu0
    %v1572 = vadd.f32 %v1529, %v1571
    %v1573 = vpop.f32.mrb[0].mxu0
    %v1574 = vadd.f32 %v1531, %v1573
    %v1575 = vpop.f32.mrb[0].mxu0
    %v1576 = vadd.f32 %v1533, %v1575
    %v1577 = vpop.f32.mrb[0].mxu0
    %v1578 = vadd.f32 %v1535, %v1577
    %1579 = vdwg.mxu0
    %1580 = vmatprep.subr.bf16.mxu0 0
    %1581 = vmatpush1.bf16.msra.mxu0 %v1026
    %1582 = vmatprep.subr.bf16.mxu0 0
    %1583 = vmatpush1.bf16.msra.mxu0 %v1029
    %1584 = vmatprep.subr.bf16.mxu0 0
    %1585 = vmatpush1.bf16.msra.mxu0 %v1032
    %1586 = vmatprep.subr.bf16.mxu0 0
    %1587 = vmatpush1.bf16.msra.mxu0 %v1035
    %1588 = vmatprep.subr.bf16.mxu0 0
    %1589 = vmatpush1.bf16.msra.mxu0 %v1038
    %1590 = vmatprep.subr.bf16.mxu0 0
    %1591 = vmatpush1.bf16.msra.mxu0 %v1041
    %1592 = vmatprep.subr.bf16.mxu0 0
    %1593 = vmatpush1.bf16.msra.mxu0 %v1044
    %1594 = vmatprep.subr.bf16.mxu0 0
    %1595 = vmatpush1.bf16.msra.mxu0 %v1047
    %1596 = vmatprep.subr.bf16.mxu0 0
    %1597 = vmatpush1.bf16.msra.mxu0 %v1050
    %1598 = vmatprep.subr.bf16.mxu0 0
    %1599 = vmatpush1.bf16.msra.mxu0 %v1053
    %1600 = vmatprep.subr.bf16.mxu0 0
    %1601 = vmatpush1.bf16.msra.mxu0 %v1056
    %1602 = vmatprep.subr.bf16.mxu0 0
    %1603 = vmatpush1.bf16.msra.mxu0 %v1059
    %1604 = vmatprep.subr.bf16.mxu0 0
    %1605 = vmatpush1.bf16.msra.mxu0 %v1062
    %1606 = vmatprep.subr.bf16.mxu0 0
    %1607 = vmatpush1.bf16.msra.mxu0 %v1065
    %1608 = vmatprep.subr.bf16.mxu0 0
    %1609 = vmatpush1.bf16.msra.mxu0 %v1068
    %1610 = vmatprep.subr.bf16.mxu0 0
    %1611 = vmatpush1.bf16.msra.mxu0 %v1071
    %1612 = vmatprep.mubr.bf16.mxu0 %v369
    %1613 = vmatmul.mubr.bf16.gmra.mrb[0].mxu0 %v368
    %v1614 = vpop.f32.mrb[0].mxu0
    %v1615 = vadd.f32 %v340, %v1614
    %v1616 = vpop.f32.mrb[0].mxu0
    %v1617 = vpop.f32.mrb[0].mxu0
    %v1618 = vadd.f32 %v340, %v1617
    %v1619 = vpop.f32.mrb[0].mxu0
    %1620 = vdwg.mxu0
    %1621 = vmatprep.subr.bf16.mxu0 0
    %1622 = vmatpush1.bf16.msra.mxu0 %v1074
    %1623 = vmatprep.subr.bf16.mxu0 0
    %1624 = vmatpush1.bf16.msra.mxu0 %v1077
    %1625 = vmatprep.subr.bf16.mxu0 0
    %1626 = vmatpush1.bf16.msra.mxu0 %v1080
    %1627 = vmatprep.subr.bf16.mxu0 0
    %1628 = vmatpush1.bf16.msra.mxu0 %v1083
    %1629 = vmatprep.subr.bf16.mxu0 0
    %1630 = vmatpush1.bf16.msra.mxu0 %v1086
    %1631 = vmatprep.subr.bf16.mxu0 0
    %1632 = vmatpush1.bf16.msra.mxu0 %v1089
    %1633 = vmatprep.subr.bf16.mxu0 0
    %1634 = vmatpush1.bf16.msra.mxu0 %v1092
    %1635 = vmatprep.subr.bf16.mxu0 0
    %1636 = vmatpush1.bf16.msra.mxu0 %v1095
    %1637 = vmatprep.subr.bf16.mxu0 0
    %1638 = vmatpush1.bf16.msra.mxu0 %v1098
    %1639 = vmatprep.subr.bf16.mxu0 0
    %1640 = vmatpush1.bf16.msra.mxu0 %v1101
    %1641 = vmatprep.subr.bf16.mxu0 0
    %1642 = vmatpush1.bf16.msra.mxu0 %v1104
    %1643 = vmatprep.subr.bf16.mxu0 0
    %1644 = vmatpush1.bf16.msra.mxu0 %v1107
    %1645 = vmatprep.subr.bf16.mxu0 0
    %1646 = vmatpush1.bf16.msra.mxu0 %v1110
    %1647 = vmatprep.subr.bf16.mxu0 0
    %1648 = vmatpush1.bf16.msra.mxu0 %v1113
    %1649 = vmatprep.subr.bf16.mxu0 0
    %1650 = vmatpush1.bf16.msra.mxu0 %v1116
    %1651 = vmatprep.subr.bf16.mxu0 0
    %1652 = vmatpush1.bf16.msra.mxu0 %v1119
    %1653 = vmatprep.mubr.bf16.mxu0 %v371
    %1654 = vmatmul.mubr.bf16.gmra.mrb[0].mxu0 %v370
    %v1655 = vpop.f32.mrb[0].mxu0
    %v1656 = vadd.f32 %v1615, %v1655
    %v1657 = vpop.f32.mrb[0].mxu0
    %v1658 = vpop.f32.mrb[0].mxu0
    %v1659 = vadd.f32 %v1618, %v1658
    %v1660 = vpop.f32.mrb[0].mxu0
    %1661 = vdwg.mxu0
    %1662 = vmatprep.subr.bf16.mxu0 0
    %1663 = vmatpush1.bf16.msra.mxu0 %v1122
    %1664 = vmatprep.subr.bf16.mxu0 0
    %1665 = vmatpush1.bf16.msra.mxu0 %v1125
    %1666 = vmatprep.subr.bf16.mxu0 0
    %1667 = vmatpush1.bf16.msra.mxu0 %v1128
    %1668 = vmatprep.subr.bf16.mxu0 0
    %1669 = vmatpush1.bf16.msra.mxu0 %v1131
    %1670 = vmatprep.subr.bf16.mxu0 0
    %1671 = vmatpush1.bf16.msra.mxu0 %v1134
    %1672 = vmatprep.subr.bf16.mxu0 0
    %1673 = vmatpush1.bf16.msra.mxu0 %v1137
    %1674 = vmatprep.subr.bf16.mxu0 0
    %1675 = vmatpush1.bf16.msra.mxu0 %v1140
    %1676 = vmatprep.subr.bf16.mxu0 0
    %1677 = vmatpush1.bf16.msra.mxu0 %v1143
    %1678 = vmatprep.subr.bf16.mxu0 0
    %1679 = vmatpush1.bf16.msra.mxu0 %v1146
    %1680 = vmatprep.subr.bf16.mxu0 0
    %1681 = vmatpush1.bf16.msra.mxu0 %v1149
    %1682 = vmatprep.subr.bf16.mxu0 0
    %1683 = vmatpush1.bf16.msra.mxu0 %v1152
    %1684 = vmatprep.subr.bf16.mxu0 0
    %1685 = vmatpush1.bf16.msra.mxu0 %v1155
    %1686 = vmatprep.subr.bf16.mxu0 0
    %1687 = vmatpush1.bf16.msra.mxu0 %v1158
    %1688 = vmatprep.subr.bf16.mxu0 0
    %1689 = vmatpush1.bf16.msra.mxu0 %v1161
    %1690 = vmatprep.subr.bf16.mxu0 0
    %1691 = vmatpush1.bf16.msra.mxu0 %v1164
    %1692 = vmatprep.subr.bf16.mxu0 0
    %1693 = vmatpush1.bf16.msra.mxu0 %v1167
    %1694 = vmatprep.mubr.bf16.mxu0 %v373
    %1695 = vmatmul.mubr.bf16.gmra.mrb[0].mxu0 %v372
    %v1696 = vpop.f32.mrb[0].mxu0
    %v1697 = vadd.f32 %v1656, %v1696
    %v1698 = vpop.f32.mrb[0].mxu0
    %v1699 = vpop.f32.mrb[0].mxu0
    %v1700 = vadd.f32 %v1659, %v1699
    %v1701 = vpop.f32.mrb[0].mxu0
    %1702 = vdwg.mxu0
    %1703 = vmatprep.subr.bf16.mxu0 0
    %1704 = vmatpush1.bf16.msra.mxu0 %v1170
    %1705 = vmatprep.subr.bf16.mxu0 0
    %1706 = vmatpush1.bf16.msra.mxu0 %v1173
    %1707 = vmatprep.subr.bf16.mxu0 0
    %1708 = vmatpush1.bf16.msra.mxu0 %v1176
    %1709 = vmatprep.subr.bf16.mxu0 0
    %1710 = vmatpush1.bf16.msra.mxu0 %v1179
    %1711 = vmatprep.subr.bf16.mxu0 0
    %1712 = vmatpush1.bf16.msra.mxu0 %v1182
    %1713 = vmatprep.subr.bf16.mxu0 0
    %1714 = vmatpush1.bf16.msra.mxu0 %v1185
    %1715 = vmatprep.subr.bf16.mxu0 0
    %1716 = vmatpush1.bf16.msra.mxu0 %v1188
    %1717 = vmatprep.subr.bf16.mxu0 0
    %1718 = vmatpush1.bf16.msra.mxu0 %v1191
    %1719 = vmatprep.subr.bf16.mxu0 0
    %1720 = vmatpush1.bf16.msra.mxu0 %v1194
    %1721 = vmatprep.subr.bf16.mxu0 0
    %1722 = vmatpush1.bf16.msra.mxu0 %v1197
    %1723 = vmatprep.subr.bf16.mxu0 0
    %1724 = vmatpush1.bf16.msra.mxu0 %v1200
    %1725 = vmatprep.subr.bf16.mxu0 0
    %1726 = vmatpush1.bf16.msra.mxu0 %v1203
    %1727 = vmatprep.subr.bf16.mxu0 0
    %1728 = vmatpush1.bf16.msra.mxu0 %v1206
    %1729 = vmatprep.subr.bf16.mxu0 0
    %1730 = vmatpush1.bf16.msra.mxu0 %v1209
    %1731 = vmatprep.subr.bf16.mxu0 0
    %1732 = vmatpush1.bf16.msra.mxu0 %v1212
    %1733 = vmatprep.subr.bf16.mxu0 0
    %1734 = vmatpush1.bf16.msra.mxu0 %v1215
    %1735 = vmatprep.mubr.bf16.mxu0 %v375
    %1736 = vmatmul.mubr.bf16.gmra.mrb[0].mxu0 %v374
    %v1737 = vpop.f32.mrb[0].mxu0
    %v1738 = vadd.f32 %v1697, %v1737
    %v1739 = vpop.f32.mrb[0].mxu0
    %v1740 = vpop.f32.mrb[0].mxu0
    %v1741 = vadd.f32 %v1700, %v1740
    %v1742 = vpop.f32.mrb[0].mxu0
    %1743 = vdwg.mxu0
    %v1744 = vpack.c.bf16 %v1576, %v1572
    %v1745 = vpack.c.bf16 %v1578, %v1574
    %v1746 = vpack.c.bf16 %v1741, %v1738
    %v1747 = vld [vmem:[#allocation7] sm:$0xff]
    %v1748 = vld [vmem:[#allocation7 + $0x8] sm:$0xff]
    %v1749 = vld [vmem:[#allocation7 + $0x10] sm:$0xff]
    %v1750 = vld [vmem:[#allocation7 + $0x18] sm:$0xf]
    %v1751 = vld [vmem:[#allocation7 + $0x1c] sm:$0xff]
    %v1752 = vld [vmem:[#allocation7 + $0x24] sm:$0xff]
    %v1753 = vld [vmem:[#allocation7 + $0x2c] sm:$0xff]
    %v1754 = vld [vmem:[#allocation7 + $0x34] sm:$0xf]
    %v1755 = vld [vmem:[#allocation7 + $0x38] sm:$0xff]
    %v1756 = vld [vmem:[#allocation7 + $0x40] sm:$0xff]
    %v1757 = vld [vmem:[#allocation7 + $0x48] sm:$0xff]
    %v1758 = vld [vmem:[#allocation7 + $0x50] sm:$0xf]
    %v1759 = vld [vmem:[#allocation7 + $0x54] sm:$0xff]
    %v1760 = vld [vmem:[#allocation7 + $0x5c] sm:$0xff]
    %v1761 = vld [vmem:[#allocation7 + $0x64] sm:$0xff]
    %v1762 = vld [vmem:[#allocation7 + $0x6c] sm:$0xf]
    %v1763 = vld [vmem:[#allocation7 + $0x70] sm:$0xff]
    %v1764 = vld [vmem:[#allocation7 + $0x78] sm:$0xff]
    %v1765 = vld [vmem:[#allocation7 + $0x80] sm:$0xff]
    %v1766 = vld [vmem:[#allocation7 + $0x88] sm:$0xf]
    %v1767 = vld [vmem:[#allocation7 + $0x8c] sm:$0xff]
    %v1768 = vld [vmem:[#allocation7 + $0x94] sm:$0xff]
    %v1769 = vld [vmem:[#allocation7 + $0x9c] sm:$0xff]
    %v1770 = vld [vmem:[#allocation7 + $0xa4] sm:$0xf]
    %v1771 = vld [vmem:[#allocation7 + $0xa8] sm:$0xff]
    %v1772 = vld [vmem:[#allocation7 + $0xb0] sm:$0xff]
    %v1773 = vld [vmem:[#allocation7 + $0xb8] sm:$0xff]
    %v1774 = vld [vmem:[#allocation7 + $0xc0] sm:$0xf]
    %v1775 = vld [vmem:[#allocation7 + $0xc4] sm:$0xff]
    %v1776 = vld [vmem:[#allocation7 + $0xcc] sm:$0xff]
    %v1777 = vld [vmem:[#allocation7 + $0xd4] sm:$0xff]
    %v1778 = vld [vmem:[#allocation7 + $0xdc] sm:$0xf]
    %v1779 = vld [vmem:[#allocation7 + $0xe0] sm:$0xff]
    %v1780 = vld [vmem:[#allocation7 + $0xe8] sm:$0xff]
    %v1781 = vld [vmem:[#allocation7 + $0xf0] sm:$0xff]
    %v1782 = vld [vmem:[#allocation7 + $0xf8] sm:$0xf]
    %v1783 = vld [vmem:[#allocation7 + $0xfc] sm:$0xff]
    %v1784 = vld [vmem:[#allocation7 + $0x104] sm:$0xff]
    %v1785 = vld [vmem:[#allocation7 + $0x10c] sm:$0xff]
    %v1786 = vld [vmem:[#allocation7 + $0x114] sm:$0xf]
    %v1787 = vld [vmem:[#allocation7 + $0x118] sm:$0xff]
    %v1788 = vld [vmem:[#allocation7 + $0x120] sm:$0xff]
    %v1789 = vld [vmem:[#allocation7 + $0x128] sm:$0xff]
    %v1790 = vld [vmem:[#allocation7 + $0x130] sm:$0xf]
    %v1791 = vld [vmem:[#allocation7 + $0x134] sm:$0xff]
    %v1792 = vld [vmem:[#allocation7 + $0x13c] sm:$0xff]
    %v1793 = vld [vmem:[#allocation7 + $0x144] sm:$0xff]
    %v1794 = vld [vmem:[#allocation7 + $0x14c] sm:$0xf]
    %v1795 = vld [vmem:[#allocation7 + $0x150] sm:$0xff]
    %v1796 = vld [vmem:[#allocation7 + $0x158] sm:$0xff]
    %v1797 = vld [vmem:[#allocation7 + $0x160] sm:$0xff]
    %v1798 = vld [vmem:[#allocation7 + $0x168] sm:$0xf]
    %v1799 = vld [vmem:[#allocation7 + $0x16c] sm:$0xff]
    %v1800 = vld [vmem:[#allocation7 + $0x174] sm:$0xff]
    %v1801 = vld [vmem:[#allocation7 + $0x17c] sm:$0xff]
    %v1802 = vld [vmem:[#allocation7 + $0x184] sm:$0xf]
    %v1803 = vld [vmem:[#allocation7 + $0x188] sm:$0xff]
    %v1804 = vld [vmem:[#allocation7 + $0x190] sm:$0xff]
    %v1805 = vld [vmem:[#allocation7 + $0x198] sm:$0xff]
    %v1806 = vld [vmem:[#allocation7 + $0x1a0] sm:$0xf]
    %v1807 = vld [vmem:[#allocation7 + $0x1a4] sm:$0xff]
    %v1808 = vld [vmem:[#allocation7 + $0x1ac] sm:$0xff]
    %v1809 = vld [vmem:[#allocation7 + $0x1b4] sm:$0xff]
    %v1810 = vld [vmem:[#allocation7 + $0x1bc] sm:$0xf]
    %v1811 = vld [vmem:[#allocation7 + $0x1c0] sm:$0xff]
    %v1812 = vld [vmem:[#allocation7 + $0x1c8] sm:$0xff]
    %v1813 = vld [vmem:[#allocation7 + $0x1d0] sm:$0xff]
    %v1814 = vld [vmem:[#allocation7 + $0x1d8] sm:$0xf]
    %v1815 = vld [vmem:[#allocation7 + $0x1dc] sm:$0xff]
    %v1816 = vld [vmem:[#allocation7 + $0x1e4] sm:$0xff]
    %v1817 = vld [vmem:[#allocation7 + $0x1ec] sm:$0xff]
    %v1818 = vld [vmem:[#allocation7 + $0x1f4] sm:$0xf]
    %v1819 = vld [vmem:[#allocation7 + $0x1f8] sm:$0xff]
    %v1820 = vld [vmem:[#allocation7 + $0x200] sm:$0xff]
    %v1821 = vld [vmem:[#allocation7 + $0x208] sm:$0xff]
    %v1822 = vld [vmem:[#allocation7 + $0x210] sm:$0xf]
    %v1823 = vld [vmem:[#allocation7 + $0x214] sm:$0xff]
    %v1824 = vld [vmem:[#allocation7 + $0x21c] sm:$0xff]
    %v1825 = vld [vmem:[#allocation7 + $0x224] sm:$0xff]
    %v1826 = vld [vmem:[#allocation7 + $0x22c] sm:$0xf]
    %v1827 = vld [vmem:[#allocation7 + $0x230] sm:$0xff]
    %v1828 = vld [vmem:[#allocation7 + $0x238] sm:$0xff]
    %v1829 = vld [vmem:[#allocation7 + $0x240] sm:$0xff]
    %v1830 = vld [vmem:[#allocation7 + $0x248] sm:$0xf]
    %v1831 = vld [vmem:[#allocation7 + $0x24c] sm:$0xff]
    %v1832 = vld [vmem:[#allocation7 + $0x254] sm:$0xff]
    %v1833 = vld [vmem:[#allocation7 + $0x25c] sm:$0xff]
    %v1834 = vld [vmem:[#allocation7 + $0x264] sm:$0xf]
    %v1835 = vld [vmem:[#allocation7 + $0x268] sm:$0xff]
    %v1836 = vld [vmem:[#allocation7 + $0x270] sm:$0xff]
    %v1837 = vld [vmem:[#allocation7 + $0x278] sm:$0xff]
    %v1838 = vld [vmem:[#allocation7 + $0x280] sm:$0xf]
    %v1839 = vld [vmem:[#allocation7 + $0x284] sm:$0xff]
    %v1840 = vld [vmem:[#allocation7 + $0x28c] sm:$0xff]
    %v1841 = vld [vmem:[#allocation7 + $0x294] sm:$0xff]
    %v1842 = vld [vmem:[#allocation7 + $0x29c] sm:$0xf]
    %v1843 = vld [vmem:[#allocation7 + $0x2a0] sm:$0xff]
    %v1844 = vld [vmem:[#allocation7 + $0x2a8] sm:$0xff]
    %v1845 = vld [vmem:[#allocation7 + $0x2b0] sm:$0xff]
    %v1846 = vld [vmem:[#allocation7 + $0x2b8] sm:$0xf]
    %v1847 = vld [vmem:[#allocation7 + $0x2bc] sm:$0xff]
    %v1848 = vld [vmem:[#allocation7 + $0x2c4] sm:$0xff]
    %v1849 = vld [vmem:[#allocation7 + $0x2cc] sm:$0xff]
    %v1850 = vld [vmem:[#allocation7 + $0x2d4] sm:$0xf]
    %v1851 = vld [vmem:[#allocation7 + $0x2d8] sm:$0xff]
    %v1852 = vld [vmem:[#allocation7 + $0x2e0] sm:$0xff]
    %v1853 = vld [vmem:[#allocation7 + $0x2e8] sm:$0xff]
    %v1854 = vld [vmem:[#allocation7 + $0x2f0] sm:$0xf]
    %v1855 = vld [vmem:[#allocation7 + $0x2f4] sm:$0xff]
    %v1856 = vld [vmem:[#allocation7 + $0x2fc] sm:$0xff]
    %v1857 = vld [vmem:[#allocation7 + $0x304] sm:$0xff]
    %v1858 = vld [vmem:[#allocation7 + $0x30c] sm:$0xf]
    %v1859 = vld [vmem:[#allocation7 + $0x310] sm:$0xff]
    %v1860 = vld [vmem:[#allocation7 + $0x318] sm:$0xff]
    %v1861 = vld [vmem:[#allocation7 + $0x320] sm:$0xff]
    %v1862 = vld [vmem:[#allocation7 + $0x328] sm:$0xf]
    %v1863 = vld [vmem:[#allocation7 + $0x32c] sm:$0xff]
    %v1864 = vld [vmem:[#allocation7 + $0x334] sm:$0xff]
    %v1865 = vld [vmem:[#allocation7 + $0x33c] sm:$0xff]
    %v1866 = vld [vmem:[#allocation7 + $0x344] sm:$0xf]
    %v1867 = vld [vmem:[#allocation7 + $0x348] sm:$0xff]
    %v1868 = vld [vmem:[#allocation7 + $0x350] sm:$0xff]
    %v1869 = vld [vmem:[#allocation7 + $0x358] sm:$0xff]
    %v1870 = vld [vmem:[#allocation7 + $0x360] sm:$0xf]
    %v1871 = vld [vmem:[#allocation7 + $0x364] sm:$0xff]
    %v1872 = vld [vmem:[#allocation7 + $0x36c] sm:$0xff]
    %v1873 = vld [vmem:[#allocation7 + $0x374] sm:$0xff]
    %v1874 = vld [vmem:[#allocation7 + $0x37c] sm:$0xf]
    %v1875 = vld [vmem:[#allocation7 + $0x380] sm:$0xff]
    %v1876 = vld [vmem:[#allocation7 + $0x388] sm:$0xff]
    %v1877 = vld [vmem:[#allocation7 + $0x390] sm:$0xff]
    %v1878 = vld [vmem:[#allocation7 + $0x398] sm:$0xf]
    %v1879 = vld [vmem:[#allocation7 + $0x39c] sm:$0xff]
    %v1880 = vld [vmem:[#allocation7 + $0x3a4] sm:$0xff]
    %v1881 = vld [vmem:[#allocation7 + $0x3ac] sm:$0xff]
    %v1882 = vld [vmem:[#allocation7 + $0x3b4] sm:$0xf]
    %v1883 = vld [vmem:[#allocation7 + $0x3b8] sm:$0xff]
    %v1884 = vld [vmem:[#allocation7 + $0x3c0] sm:$0xff]
    %v1885 = vld [vmem:[#allocation7 + $0x3c8] sm:$0xff]
    %v1886 = vld [vmem:[#allocation7 + $0x3d0] sm:$0xf]
    %v1887 = vld [vmem:[#allocation7 + $0x3d4] sm:$0xff]
    %v1888 = vld [vmem:[#allocation7 + $0x3dc] sm:$0xff]
    %v1889 = vld [vmem:[#allocation7 + $0x3e4] sm:$0xff]
    %v1890 = vld [vmem:[#allocation7 + $0x3ec] sm:$0xf]
    %v1891 = vld [vmem:[#allocation7 + $0x3f0] sm:$0xff]
    %v1892 = vld [vmem:[#allocation7 + $0x3f8] sm:$0xff]
    %v1893 = vld [vmem:[#allocation7 + $0x400] sm:$0xff]
    %v1894 = vld [vmem:[#allocation7 + $0x408] sm:$0xf]
    %v1895 = vld [vmem:[#allocation7 + $0x40c] sm:$0xff]
    %v1896 = vld [vmem:[#allocation7 + $0x414] sm:$0xff]
    %v1897 = vld [vmem:[#allocation7 + $0x41c] sm:$0xff]
    %v1898 = vld [vmem:[#allocation7 + $0x424] sm:$0xf]
    %v1899 = vld [vmem:[#allocation7 + $0x428] sm:$0xff]
    %v1900 = vld [vmem:[#allocation7 + $0x430] sm:$0xff]
    %v1901 = vld [vmem:[#allocation7 + $0x438] sm:$0xff]
    %v1902 = vld [vmem:[#allocation7 + $0x440] sm:$0xf]
    %v1903 = vld [vmem:[#allocation7 + $0x444] sm:$0xff]
    %v1904 = vld [vmem:[#allocation7 + $0x44c] sm:$0xff]
    %v1905 = vld [vmem:[#allocation7 + $0x454] sm:$0xff]
    %v1906 = vld [vmem:[#allocation7 + $0x45c] sm:$0xf]
    %v1907 = vld [vmem:[#allocation7 + $0x460] sm:$0xff]
    %v1908 = vld [vmem:[#allocation7 + $0x468] sm:$0xff]
    %v1909 = vld [vmem:[#allocation7 + $0x470] sm:$0xff]
    %v1910 = vld [vmem:[#allocation7 + $0x478] sm:$0xf]
    %v1911 = vld [vmem:[#allocation7 + $0x47c] sm:$0xff]
    %v1912 = vld [vmem:[#allocation7 + $0x484] sm:$0xff]
    %v1913 = vld [vmem:[#allocation7 + $0x48c] sm:$0xff]
    %v1914 = vld [vmem:[#allocation7 + $0x494] sm:$0xf]
    %v1915 = vld [vmem:[#allocation7 + $0x498] sm:$0xff]
    %v1916 = vld [vmem:[#allocation7 + $0x4a0] sm:$0xff]
    %v1917 = vld [vmem:[#allocation7 + $0x4a8] sm:$0xff]
    %v1918 = vld [vmem:[#allocation7 + $0x4b0] sm:$0xf]
    %v1919 = vld [vmem:[#allocation7 + $0x4b4] sm:$0xff]
    %v1920 = vld [vmem:[#allocation7 + $0x4bc] sm:$0xff]
    %v1921 = vld [vmem:[#allocation7 + $0x4c4] sm:$0xff]
    %v1922 = vld [vmem:[#allocation7 + $0x4cc] sm:$0xf]
    %v1923 = vld [vmem:[#allocation7 + $0x4d0] sm:$0xff]
    %v1924 = vld [vmem:[#allocation7 + $0x4d8] sm:$0xff]
    %v1925 = vld [vmem:[#allocation7 + $0x4e0] sm:$0xff]
    %v1926 = vld [vmem:[#allocation7 + $0x4e8] sm:$0xf]
    %v1927 = vld [vmem:[#allocation7 + $0x4ec] sm:$0xff]
    %v1928 = vld [vmem:[#allocation7 + $0x4f4] sm:$0xff]
    %v1929 = vld [vmem:[#allocation7 + $0x4fc] sm:$0xff]
    %v1930 = vld [vmem:[#allocation7 + $0x504] sm:$0xf]
    %v1931 = vld [vmem:[#allocation7 + $0x508] sm:$0xff]
    %v1932 = vld [vmem:[#allocation7 + $0x510] sm:$0xff]
    %v1933 = vld [vmem:[#allocation7 + $0x518] sm:$0xff]
    %v1934 = vld [vmem:[#allocation7 + $0x520] sm:$0xf]
    %v1935 = vld [vmem:[#allocation7 + $0x524] sm:$0xff]
    %v1936 = vld [vmem:[#allocation7 + $0x52c] sm:$0xff]
    %v1937 = vld [vmem:[#allocation7 + $0x534] sm:$0xff]
    %v1938 = vld [vmem:[#allocation7 + $0x53c] sm:$0xf]
    %v1939 = vld [vmem:[%s4] sm:$0xff]
    %v1941 = vlaneseq
    %v1942 = vshrl.u32 %v1941, 7
    %v1943 = vsub.s32 0, %v1942
    %v1944 = vrot.slane %v1939, %v1943
    %v1945 = vlaneseq
    %v1946 = vshrl.u32 %v1945, 7
    %v1947 = vsub.s32 1, %v1946
    %v1948 = vrot.slane %v1939, %v1947
    %v1949 = vlaneseq
    %v1950 = vshrl.u32 %v1949, 7
    %v1951 = vsub.s32 2, %v1950
    %v1952 = vrot.slane %v1939, %v1951
    %v1953 = vlaneseq
    %v1954 = vshrl.u32 %v1953, 7
    %v1955 = vsub.s32 3, %v1954
    %v1956 = vrot.slane %v1939, %v1955
    %v1957 = vlaneseq
    %v1958 = vshrl.u32 %v1957, 7
    %v1959 = vsub.s32 4, %v1958
    %v1960 = vrot.slane %v1939, %v1959
    %v1961 = vlaneseq
    %v1962 = vshrl.u32 %v1961, 7
    %v1963 = vsub.s32 5, %v1962
    %v1964 = vrot.slane %v1939, %v1963
    %v1965 = vlaneseq
    %v1966 = vshrl.u32 %v1965, 7
    %v1967 = vsub.s32 6, %v1966
    %v1968 = vrot.slane %v1939, %v1967
    %v2168 = vunpack.c.l.b16 %v1747
    %v2169 = vunpack.c.h.b16 %v1747
    %v2170 = vunpack.c.l.b16 %v1748
    %v2171 = vunpack.c.h.b16 %v1748
    %v2172 = vunpack.c.l.b16 %v1749
    %v2173 = vunpack.c.h.b16 %v1749
    %v2174 = vunpack.c.l.b16 %v1750
    %v2175 = vunpack.c.l.b16 %v1751
    %v2176 = vunpack.c.h.b16 %v1751
    %v2177 = vunpack.c.l.b16 %v1752
    %v2178 = vunpack.c.h.b16 %v1752
    %v2179 = vunpack.c.l.b16 %v1753
    %v2180 = vunpack.c.h.b16 %v1753
    %v2181 = vunpack.c.l.b16 %v1754
    %v2182 = vunpack.c.l.b16 %v1755
    %v2183 = vunpack.c.h.b16 %v1755
    %v2184 = vunpack.c.l.b16 %v1756
    %v2185 = vunpack.c.h.b16 %v1756
    %v2186 = vunpack.c.l.b16 %v1757
    %v2187 = vunpack.c.h.b16 %v1757
    %v2188 = vunpack.c.l.b16 %v1758
    %v2189 = vunpack.c.l.b16 %v1759
    %v2190 = vunpack.c.h.b16 %v1759
    %v2191 = vunpack.c.l.b16 %v1760
    %v2192 = vunpack.c.h.b16 %v1760
    %v2193 = vunpack.c.l.b16 %v1761
    %v2194 = vunpack.c.h.b16 %v1761
    %v2195 = vunpack.c.l.b16 %v1762
    %v2196 = vunpack.c.l.b16 %v1763
    %v2197 = vunpack.c.h.b16 %v1763
    %v2198 = vunpack.c.l.b16 %v1764
    %v2199 = vunpack.c.h.b16 %v1764
    %v2200 = vunpack.c.l.b16 %v1765
    %v2201 = vunpack.c.h.b16 %v1765
    %v2202 = vunpack.c.l.b16 %v1766
    %v2203 = vunpack.c.l.b16 %v1767
    %v2204 = vunpack.c.h.b16 %v1767
    %v2205 = vunpack.c.l.b16 %v1768
    %v2206 = vunpack.c.h.b16 %v1768
    %v2207 = vunpack.c.l.b16 %v1769
    %v2208 = vunpack.c.h.b16 %v1769
    %v2209 = vunpack.c.l.b16 %v1770
    %v2210 = vunpack.c.l.b16 %v1771
    %v2211 = vunpack.c.h.b16 %v1771
    %v2212 = vunpack.c.l.b16 %v1772
    %v2213 = vunpack.c.h.b16 %v1772
    %v2214 = vunpack.c.l.b16 %v1773
    %v2215 = vunpack.c.h.b16 %v1773
    %v2216 = vunpack.c.l.b16 %v1774
    %v2217 = vunpack.c.l.b16 %v1775
    %v2218 = vunpack.c.h.b16 %v1775
    %v2219 = vunpack.c.l.b16 %v1776
    %v2220 = vunpack.c.h.b16 %v1776
    %v2221 = vunpack.c.l.b16 %v1777
    %v2222 = vunpack.c.h.b16 %v1777
    %v2223 = vunpack.c.l.b16 %v1778
    %v2224 = vunpack.c.l.b16 %v1779
    %v2225 = vunpack.c.h.b16 %v1779
    %v2226 = vunpack.c.l.b16 %v1780
    %v2227 = vunpack.c.h.b16 %v1780
    %v2228 = vunpack.c.l.b16 %v1781
    %v2229 = vunpack.c.h.b16 %v1781
    %v2230 = vunpack.c.l.b16 %v1782
    %v2231 = vunpack.c.l.b16 %v1783
    %v2232 = vunpack.c.h.b16 %v1783
    %v2233 = vunpack.c.l.b16 %v1784
    %v2234 = vunpack.c.h.b16 %v1784
    %v2235 = vunpack.c.l.b16 %v1785
    %v2236 = vunpack.c.h.b16 %v1785
    %v2237 = vunpack.c.l.b16 %v1786
    %v2238 = vunpack.c.l.b16 %v1787
    %v2239 = vunpack.c.h.b16 %v1787
    %v2240 = vunpack.c.l.b16 %v1788
    %v2241 = vunpack.c.h.b16 %v1788
    %v2242 = vunpack.c.l.b16 %v1789
    %v2243 = vunpack.c.h.b16 %v1789
    %v2244 = vunpack.c.l.b16 %v1790
    %v2245 = vunpack.c.l.b16 %v1791
    %v2246 = vunpack.c.h.b16 %v1791
    %v2247 = vunpack.c.l.b16 %v1792
    %v2248 = vunpack.c.h.b16 %v1792
    %v2249 = vunpack.c.l.b16 %v1793
    %v2250 = vunpack.c.h.b16 %v1793
    %v2251 = vunpack.c.l.b16 %v1794
    %v2252 = vunpack.c.l.b16 %v1795
    %v2253 = vunpack.c.h.b16 %v1795
    %v2254 = vunpack.c.l.b16 %v1796
    %v2255 = vunpack.c.h.b16 %v1796
    %v2256 = vunpack.c.l.b16 %v1797
    %v2257 = vunpack.c.h.b16 %v1797
    %v2258 = vunpack.c.l.b16 %v1798
    %v2259 = vunpack.c.l.b16 %v1799
    %v2260 = vunpack.c.h.b16 %v1799
    %v2261 = vunpack.c.l.b16 %v1800
    %v2262 = vunpack.c.h.b16 %v1800
    %v2263 = vunpack.c.l.b16 %v1801
    %v2264 = vunpack.c.h.b16 %v1801
    %v2265 = vunpack.c.l.b16 %v1802
    %v2266 = vunpack.c.l.b16 %v1803
    %v2267 = vunpack.c.h.b16 %v1803
    %v2268 = vunpack.c.l.b16 %v1804
    %v2269 = vunpack.c.h.b16 %v1804
    %v2270 = vunpack.c.l.b16 %v1805
    %v2271 = vunpack.c.h.b16 %v1805
    %v2272 = vunpack.c.l.b16 %v1806
    %v2273 = vunpack.c.l.b16 %v1807
    %v2274 = vunpack.c.h.b16 %v1807
    %v2275 = vunpack.c.l.b16 %v1808
    %v2276 = vunpack.c.h.b16 %v1808
    %v2277 = vunpack.c.l.b16 %v1809
    %v2278 = vunpack.c.h.b16 %v1809
    %v2279 = vunpack.c.l.b16 %v1810
    %v2280 = vunpack.c.l.b16 %v1811
    %v2281 = vunpack.c.h.b16 %v1811
    %v2282 = vunpack.c.l.b16 %v1812
    %v2283 = vunpack.c.h.b16 %v1812
    %v2284 = vunpack.c.l.b16 %v1813
    %v2285 = vunpack.c.h.b16 %v1813
    %v2286 = vunpack.c.l.b16 %v1814
    %v2287 = vunpack.c.l.b16 %v1815
    %v2288 = vunpack.c.h.b16 %v1815
    %v2289 = vunpack.c.l.b16 %v1816
    %v2290 = vunpack.c.h.b16 %v1816
    %v2291 = vunpack.c.l.b16 %v1817
    %v2292 = vunpack.c.h.b16 %v1817
    %v2293 = vunpack.c.l.b16 %v1818
    %v2294 = vunpack.c.l.b16 %v1819
    %v2295 = vunpack.c.h.b16 %v1819
    %v2296 = vunpack.c.l.b16 %v1820
    %v2297 = vunpack.c.h.b16 %v1820
    %v2298 = vunpack.c.l.b16 %v1821
    %v2299 = vunpack.c.h.b16 %v1821
    %v2300 = vunpack.c.l.b16 %v1822
    %v2301 = vunpack.c.l.b16 %v1823
    %v2302 = vunpack.c.h.b16 %v1823
    %v2303 = vunpack.c.l.b16 %v1824
    %v2304 = vunpack.c.h.b16 %v1824
    %v2305 = vunpack.c.l.b16 %v1825
    %v2306 = vunpack.c.h.b16 %v1825
    %v2307 = vunpack.c.l.b16 %v1826
    %v2308 = vunpack.c.l.b16 %v1827
    %v2309 = vunpack.c.h.b16 %v1827
    %v2310 = vunpack.c.l.b16 %v1828
    %v2311 = vunpack.c.h.b16 %v1828
    %v2312 = vunpack.c.l.b16 %v1829
    %v2313 = vunpack.c.h.b16 %v1829
    %v2314 = vunpack.c.l.b16 %v1830
    %v2315 = vunpack.c.l.b16 %v1831
    %v2316 = vunpack.c.h.b16 %v1831
    %v2317 = vunpack.c.l.b16 %v1832
    %v2318 = vunpack.c.h.b16 %v1832
    %v2319 = vunpack.c.l.b16 %v1833
    %v2320 = vunpack.c.h.b16 %v1833
    %v2321 = vunpack.c.l.b16 %v1834
    %v2322 = vunpack.c.l.b16 %v1835
    %v2323 = vunpack.c.h.b16 %v1835
    %v2324 = vunpack.c.l.b16 %v1836
    %v2325 = vunpack.c.h.b16 %v1836
    %v2326 = vunpack.c.l.b16 %v1837
    %v2327 = vunpack.c.h.b16 %v1837
    %v2328 = vunpack.c.l.b16 %v1838
    %v2329 = vunpack.c.l.b16 %v1839
    %v2330 = vunpack.c.h.b16 %v1839
    %v2331 = vunpack.c.l.b16 %v1840
    %v2332 = vunpack.c.h.b16 %v1840
    %v2333 = vunpack.c.l.b16 %v1841
    %v2334 = vunpack.c.h.b16 %v1841
    %v2335 = vunpack.c.l.b16 %v1842
    %v2336 = vunpack.c.l.b16 %v1843
    %v2337 = vunpack.c.h.b16 %v1843
    %v2338 = vunpack.c.l.b16 %v1844
    %v2339 = vunpack.c.h.b16 %v1844
    %v2340 = vunpack.c.l.b16 %v1845
    %v2341 = vunpack.c.h.b16 %v1845
    %v2342 = vunpack.c.l.b16 %v1846
    %v2343 = vunpack.c.l.b16 %v1847
    %v2344 = vunpack.c.h.b16 %v1847
    %v2345 = vunpack.c.l.b16 %v1848
    %v2346 = vunpack.c.h.b16 %v1848
    %v2347 = vunpack.c.l.b16 %v1849
    %v2348 = vunpack.c.h.b16 %v1849
    %v2349 = vunpack.c.l.b16 %v1850
    %v2350 = vunpack.c.l.b16 %v1851
    %v2351 = vunpack.c.h.b16 %v1851
    %v2352 = vunpack.c.l.b16 %v1852
    %v2353 = vunpack.c.h.b16 %v1852
    %v2354 = vunpack.c.l.b16 %v1853
    %v2355 = vunpack.c.h.b16 %v1853
    %v2356 = vunpack.c.l.b16 %v1854
    %v2357 = vunpack.c.l.b16 %v1855
    %v2358 = vunpack.c.h.b16 %v1855
    %v2359 = vunpack.c.l.b16 %v1856
    %v2360 = vunpack.c.h.b16 %v1856
    %v2361 = vunpack.c.l.b16 %v1857
    %v2362 = vunpack.c.h.b16 %v1857
    %v2363 = vunpack.c.l.b16 %v1858
    %v2364 = vunpack.c.l.b16 %v1859
    %v2365 = vunpack.c.h.b16 %v1859
    %v2366 = vunpack.c.l.b16 %v1860
    %v2367 = vunpack.c.h.b16 %v1860
    %v2368 = vunpack.c.l.b16 %v1861
    %v2369 = vunpack.c.h.b16 %v1861
    %v2370 = vunpack.c.l.b16 %v1862
    %v2371 = vunpack.c.l.b16 %v1863
    %v2372 = vunpack.c.h.b16 %v1863
    %v2373 = vunpack.c.l.b16 %v1864
    %v2374 = vunpack.c.h.b16 %v1864
    %v2375 = vunpack.c.l.b16 %v1865
    %v2376 = vunpack.c.h.b16 %v1865
    %v2377 = vunpack.c.l.b16 %v1866
    %v2378 = vunpack.c.l.b16 %v1867
    %v2379 = vunpack.c.h.b16 %v1867
    %v2380 = vunpack.c.l.b16 %v1868
    %v2381 = vunpack.c.h.b16 %v1868
    %v2382 = vunpack.c.l.b16 %v1869
    %v2383 = vunpack.c.h.b16 %v1869
    %v2384 = vunpack.c.l.b16 %v1870
    %v2385 = vunpack.c.l.b16 %v1871
    %v2386 = vunpack.c.h.b16 %v1871
    %v2387 = vunpack.c.l.b16 %v1872
    %v2388 = vunpack.c.h.b16 %v1872
    %v2389 = vunpack.c.l.b16 %v1873
    %v2390 = vunpack.c.h.b16 %v1873
    %v2391 = vunpack.c.l.b16 %v1874
    %v2392 = vunpack.c.l.b16 %v1875
    %v2393 = vunpack.c.h.b16 %v1875
    %v2394 = vunpack.c.l.b16 %v1876
    %v2395 = vunpack.c.h.b16 %v1876
    %v2396 = vunpack.c.l.b16 %v1877
    %v2397 = vunpack.c.h.b16 %v1877
    %v2398 = vunpack.c.l.b16 %v1878
    %v2399 = vunpack.c.l.b16 %v1879
    %v2400 = vunpack.c.h.b16 %v1879
    %v2401 = vunpack.c.l.b16 %v1880
    %v2402 = vunpack.c.h.b16 %v1880
    %v2403 = vunpack.c.l.b16 %v1881
    %v2404 = vunpack.c.h.b16 %v1881
    %v2405 = vunpack.c.l.b16 %v1882
    %v2406 = vunpack.c.l.b16 %v1883
    %v2407 = vunpack.c.h.b16 %v1883
    %v2408 = vunpack.c.l.b16 %v1884
    %v2409 = vunpack.c.h.b16 %v1884
    %v2410 = vunpack.c.l.b16 %v1885
    %v2411 = vunpack.c.h.b16 %v1885
    %v2412 = vunpack.c.l.b16 %v1886
    %v2413 = vunpack.c.l.b16 %v1887
    %v2414 = vunpack.c.h.b16 %v1887
    %v2415 = vunpack.c.l.b16 %v1888
    %v2416 = vunpack.c.h.b16 %v1888
    %v2417 = vunpack.c.l.b16 %v1889
    %v2418 = vunpack.c.h.b16 %v1889
    %v2419 = vunpack.c.l.b16 %v1890
    %v2420 = vunpack.c.l.b16 %v1891
    %v2421 = vunpack.c.h.b16 %v1891
    %v2422 = vunpack.c.l.b16 %v1892
    %v2423 = vunpack.c.h.b16 %v1892
    %v2424 = vunpack.c.l.b16 %v1893
    %v2425 = vunpack.c.h.b16 %v1893
    %v2426 = vunpack.c.l.b16 %v1894
    %v2427 = vunpack.c.l.b16 %v1895
    %v2428 = vunpack.c.h.b16 %v1895
    %v2429 = vunpack.c.l.b16 %v1896
    %v2430 = vunpack.c.h.b16 %v1896
    %v2431 = vunpack.c.l.b16 %v1897
    %v2432 = vunpack.c.h.b16 %v1897
    %v2433 = vunpack.c.l.b16 %v1898
    %v2434 = vunpack.c.l.b16 %v1899
    %v2435 = vunpack.c.h.b16 %v1899
    %v2436 = vunpack.c.l.b16 %v1900
    %v2437 = vunpack.c.h.b16 %v1900
    %v2438 = vunpack.c.l.b16 %v1901
    %v2439 = vunpack.c.h.b16 %v1901
    %v2440 = vunpack.c.l.b16 %v1902
    %v2441 = vunpack.c.l.b16 %v1903
    %v2442 = vunpack.c.h.b16 %v1903
    %v2443 = vunpack.c.l.b16 %v1904
    %v2444 = vunpack.c.h.b16 %v1904
    %v2445 = vunpack.c.l.b16 %v1905
    %v2446 = vunpack.c.h.b16 %v1905
    %v2447 = vunpack.c.l.b16 %v1906
    %v2448 = vunpack.c.l.b16 %v1907
    %v2449 = vunpack.c.h.b16 %v1907
    %v2450 = vunpack.c.l.b16 %v1908
    %v2451 = vunpack.c.h.b16 %v1908
    %v2452 = vunpack.c.l.b16 %v1909
    %v2453 = vunpack.c.h.b16 %v1909
    %v2454 = vunpack.c.l.b16 %v1910
    %v2455 = vunpack.c.l.b16 %v1911
    %v2456 = vunpack.c.h.b16 %v1911
    %v2457 = vunpack.c.l.b16 %v1912
    %v2458 = vunpack.c.h.b16 %v1912
    %v2459 = vunpack.c.l.b16 %v1913
    %v2460 = vunpack.c.h.b16 %v1913
    %v2461 = vunpack.c.l.b16 %v1914
    %v2462 = vunpack.c.l.b16 %v1915
    %v2463 = vunpack.c.h.b16 %v1915
    %v2464 = vunpack.c.l.b16 %v1916
    %v2465 = vunpack.c.h.b16 %v1916
    %v2466 = vunpack.c.l.b16 %v1917
    %v2467 = vunpack.c.h.b16 %v1917
    %v2468 = vunpack.c.l.b16 %v1918
    %v2469 = vunpack.c.l.b16 %v1919
    %v2470 = vunpack.c.h.b16 %v1919
    %v2471 = vunpack.c.l.b16 %v1920
    %v2472 = vunpack.c.h.b16 %v1920
    %v2473 = vunpack.c.l.b16 %v1921
    %v2474 = vunpack.c.h.b16 %v1921
    %v2475 = vunpack.c.l.b16 %v1922
    %v2476 = vunpack.c.l.b16 %v1923
    %v2477 = vunpack.c.h.b16 %v1923
    %v2478 = vunpack.c.l.b16 %v1924
    %v2479 = vunpack.c.h.b16 %v1924
    %v2480 = vunpack.c.l.b16 %v1925
    %v2481 = vunpack.c.h.b16 %v1925
    %v2482 = vunpack.c.l.b16 %v1926
    %v2483 = vunpack.c.l.b16 %v1927
    %v2484 = vunpack.c.h.b16 %v1927
    %v2485 = vunpack.c.l.b16 %v1928
    %v2486 = vunpack.c.h.b16 %v1928
    %v2487 = vunpack.c.l.b16 %v1929
    %v2488 = vunpack.c.h.b16 %v1929
    %v2489 = vunpack.c.l.b16 %v1930
    %v2490 = vunpack.c.l.b16 %v1931
    %v2491 = vunpack.c.h.b16 %v1931
    %v2492 = vunpack.c.l.b16 %v1932
    %v2493 = vunpack.c.h.b16 %v1932
    %v2494 = vunpack.c.l.b16 %v1933
    %v2495 = vunpack.c.h.b16 %v1933
    %v2496 = vunpack.c.l.b16 %v1934
    %v2497 = vunpack.c.l.b16 %v1935
    %v2498 = vunpack.c.h.b16 %v1935
    %v2499 = vunpack.c.l.b16 %v1936
    %v2500 = vunpack.c.h.b16 %v1936
    %v2501 = vunpack.c.l.b16 %v1937
    %v2502 = vunpack.c.h.b16 %v1937
    %v2503 = vunpack.c.l.b16 %v1938
    %v2504 = vpack.c.b16 %v2175, %v2168
    %v2505 = vpack.c.b16 %v2176, %v2169
    %v2506 = vpack.c.b16 %v2177, %v2170
    %v2507 = vpack.c.b16 %v2178, %v2171
    %v2508 = vpack.c.b16 %v2179, %v2172
    %v2509 = vpack.c.b16 %v2180, %v2173
    %v2510 = vpack.c.b16 %v2181, %v2174
    %v2511 = vpack.c.b16 %v2189, %v2182
    %v2512 = vpack.c.b16 %v2190, %v2183
    %v2513 = vpack.c.b16 %v2191, %v2184
    %v2514 = vpack.c.b16 %v2192, %v2185
    %v2515 = vpack.c.b16 %v2193, %v2186
    %v2516 = vpack.c.b16 %v2194, %v2187
    %v2517 = vpack.c.b16 %v2195, %v2188
    %v2518 = vpack.c.b16 %v2203, %v2196
    %v2519 = vpack.c.b16 %v2204, %v2197
    %v2520 = vpack.c.b16 %v2205, %v2198
    %v2521 = vpack.c.b16 %v2206, %v2199
    %v2522 = vpack.c.b16 %v2207, %v2200
    %v2523 = vpack.c.b16 %v2208, %v2201
    %v2524 = vpack.c.b16 %v2209, %v2202
    %v2525 = vpack.c.b16 %v2217, %v2210
    %v2526 = vpack.c.b16 %v2218, %v2211
    %v2527 = vpack.c.b16 %v2219, %v2212
    %v2528 = vpack.c.b16 %v2220, %v2213
    %v2529 = vpack.c.b16 %v2221, %v2214
    %v2530 = vpack.c.b16 %v2222, %v2215
    %v2531 = vpack.c.b16 %v2223, %v2216
    %v2532 = vpack.c.b16 %v2231, %v2224
    %v2533 = vpack.c.b16 %v2232, %v2225
    %v2534 = vpack.c.b16 %v2233, %v2226
    %v2535 = vpack.c.b16 %v2234, %v2227
    %v2536 = vpack.c.b16 %v2235, %v2228
    %v2537 = vpack.c.b16 %v2236, %v2229
    %v2538 = vpack.c.b16 %v2237, %v2230
    %v2539 = vpack.c.b16 %v2245, %v2238
    %v2540 = vpack.c.b16 %v2246, %v2239
    %v2541 = vpack.c.b16 %v2247, %v2240
    %v2542 = vpack.c.b16 %v2248, %v2241
    %v2543 = vpack.c.b16 %v2249, %v2242
    %v2544 = vpack.c.b16 %v2250, %v2243
    %v2545 = vpack.c.b16 %v2251, %v2244
    %v2546 = vpack.c.b16 %v2259, %v2252
    %v2547 = vpack.c.b16 %v2260, %v2253
    %v2548 = vpack.c.b16 %v2261, %v2254
    %v2549 = vpack.c.b16 %v2262, %v2255
    %v2550 = vpack.c.b16 %v2263, %v2256
    %v2551 = vpack.c.b16 %v2264, %v2257
    %v2552 = vpack.c.b16 %v2265, %v2258
    %v2553 = vpack.c.b16 %v2273, %v2266
    %v2554 = vpack.c.b16 %v2274, %v2267
    %v2555 = vpack.c.b16 %v2275, %v2268
    %v2556 = vpack.c.b16 %v2276, %v2269
    %v2557 = vpack.c.b16 %v2277, %v2270
    %v2558 = vpack.c.b16 %v2278, %v2271
    %v2559 = vpack.c.b16 %v2279, %v2272
    %v2560 = vpack.c.b16 %v2287, %v2280
    %v2561 = vpack.c.b16 %v2288, %v2281
    %v2562 = vpack.c.b16 %v2289, %v2282
    %v2563 = vpack.c.b16 %v2290, %v2283
    %v2564 = vpack.c.b16 %v2291, %v2284
    %v2565 = vpack.c.b16 %v2292, %v2285
    %v2566 = vpack.c.b16 %v2293, %v2286
    %v2567 = vpack.c.b16 %v2301, %v2294
    %v2568 = vpack.c.b16 %v2302, %v2295
    %v2569 = vpack.c.b16 %v2303, %v2296
    %v2570 = vpack.c.b16 %v2304, %v2297
    %v2571 = vpack.c.b16 %v2305, %v2298
    %v2572 = vpack.c.b16 %v2306, %v2299
    %v2573 = vpack.c.b16 %v2307, %v2300
    %v2574 = vpack.c.b16 %v2315, %v2308
    %v2575 = vpack.c.b16 %v2316, %v2309
    %v2576 = vpack.c.b16 %v2317, %v2310
    %v2577 = vpack.c.b16 %v2318, %v2311
    %v2578 = vpack.c.b16 %v2319, %v2312
    %v2579 = vpack.c.b16 %v2320, %v2313
    %v2580 = vpack.c.b16 %v2321, %v2314
    %v2581 = vpack.c.b16 %v2329, %v2322
    %v2582 = vpack.c.b16 %v2330, %v2323
    %v2583 = vpack.c.b16 %v2331, %v2324
    %v2584 = vpack.c.b16 %v2332, %v2325
    %v2585 = vpack.c.b16 %v2333, %v2326
    %v2586 = vpack.c.b16 %v2334, %v2327
    %v2587 = vpack.c.b16 %v2335, %v2328
    %v2588 = vpack.c.b16 %v2343, %v2336
    %v2589 = vpack.c.b16 %v2344, %v2337
    %v2590 = vpack.c.b16 %v2345, %v2338
    %v2591 = vpack.c.b16 %v2346, %v2339
    %v2592 = vpack.c.b16 %v2347, %v2340
    %v2593 = vpack.c.b16 %v2348, %v2341
    %v2594 = vpack.c.b16 %v2349, %v2342
    %v2595 = vpack.c.b16 %v2357, %v2350
    %v2596 = vpack.c.b16 %v2358, %v2351
    %v2597 = vpack.c.b16 %v2359, %v2352
    %v2598 = vpack.c.b16 %v2360, %v2353
    %v2599 = vpack.c.b16 %v2361, %v2354
    %v2600 = vpack.c.b16 %v2362, %v2355
    %v2601 = vpack.c.b16 %v2363, %v2356
    %v2602 = vpack.c.b16 %v2371, %v2364
    %v2603 = vpack.c.b16 %v2372, %v2365
    %v2604 = vpack.c.b16 %v2373, %v2366
    %v2605 = vpack.c.b16 %v2374, %v2367
    %v2606 = vpack.c.b16 %v2375, %v2368
    %v2607 = vpack.c.b16 %v2376, %v2369
    %v2608 = vpack.c.b16 %v2377, %v2370
    %v2609 = vpack.c.b16 %v2385, %v2378
    %v2610 = vpack.c.b16 %v2386, %v2379
    %v2611 = vpack.c.b16 %v2387, %v2380
    %v2612 = vpack.c.b16 %v2388, %v2381
    %v2613 = vpack.c.b16 %v2389, %v2382
    %v2614 = vpack.c.b16 %v2390, %v2383
    %v2615 = vpack.c.b16 %v2391, %v2384
    %v2616 = vpack.c.b16 %v2399, %v2392
    %v2617 = vpack.c.b16 %v2400, %v2393
    %v2618 = vpack.c.b16 %v2401, %v2394
    %v2619 = vpack.c.b16 %v2402, %v2395
    %v2620 = vpack.c.b16 %v2403, %v2396
    %v2621 = vpack.c.b16 %v2404, %v2397
    %v2622 = vpack.c.b16 %v2405, %v2398
    %v2623 = vpack.c.b16 %v2413, %v2406
    %v2624 = vpack.c.b16 %v2414, %v2407
    %v2625 = vpack.c.b16 %v2415, %v2408
    %v2626 = vpack.c.b16 %v2416, %v2409
    %v2627 = vpack.c.b16 %v2417, %v2410
    %v2628 = vpack.c.b16 %v2418, %v2411
    %v2629 = vpack.c.b16 %v2419, %v2412
    %v2630 = vpack.c.b16 %v2427, %v2420
    %v2631 = vpack.c.b16 %v2428, %v2421
    %v2632 = vpack.c.b16 %v2429, %v2422
    %v2633 = vpack.c.b16 %v2430, %v2423
    %v2634 = vpack.c.b16 %v2431, %v2424
    %v2635 = vpack.c.b16 %v2432, %v2425
    %v2636 = vpack.c.b16 %v2433, %v2426
    %v2637 = vpack.c.b16 %v2441, %v2434
    %v2638 = vpack.c.b16 %v2442, %v2435
    %v2639 = vpack.c.b16 %v2443, %v2436
    %v2640 = vpack.c.b16 %v2444, %v2437
    %v2641 = vpack.c.b16 %v2445, %v2438
    %v2642 = vpack.c.b16 %v2446, %v2439
    %v2643 = vpack.c.b16 %v2447, %v2440
    %v2644 = vpack.c.b16 %v2455, %v2448
    %v2645 = vpack.c.b16 %v2456, %v2449
    %v2646 = vpack.c.b16 %v2457, %v2450
    %v2647 = vpack.c.b16 %v2458, %v2451
    %v2648 = vpack.c.b16 %v2459, %v2452
    %v2649 = vpack.c.b16 %v2460, %v2453
    %v2650 = vpack.c.b16 %v2461, %v2454
    %v2651 = vpack.c.b16 %v2469, %v2462
    %v2652 = vpack.c.b16 %v2470, %v2463
    %v2653 = vpack.c.b16 %v2471, %v2464
    %v2654 = vpack.c.b16 %v2472, %v2465
    %v2655 = vpack.c.b16 %v2473, %v2466
    %v2656 = vpack.c.b16 %v2474, %v2467
    %v2657 = vpack.c.b16 %v2475, %v2468
    %v2658 = vpack.c.b16 %v2483, %v2476
    %v2659 = vpack.c.b16 %v2484, %v2477
    %v2660 = vpack.c.b16 %v2485, %v2478
    %v2661 = vpack.c.b16 %v2486, %v2479
    %v2662 = vpack.c.b16 %v2487, %v2480
    %v2663 = vpack.c.b16 %v2488, %v2481
    %v2664 = vpack.c.b16 %v2489, %v2482
    %v2665 = vpack.c.b16 %v2497, %v2490
    %v2666 = vpack.c.b16 %v2498, %v2491
    %v2667 = vpack.c.b16 %v2499, %v2492
    %v2668 = vpack.c.b16 %v2500, %v2493
    %v2669 = vpack.c.b16 %v2501, %v2494
    %v2670 = vpack.c.b16 %v2502, %v2495
    %v2671 = vpack.c.b16 %v2503, %v2496
    %2840 = vmatprep.subr.bf16.mxu0 %v2505
    %2841 = vmatpush1.bf16.msra.mxu0 %v2504
    %2842 = vmatprep.subr.bf16.mxu0 %v2512
    %2843 = vmatpush1.bf16.msra.mxu0 %v2511
    %2844 = vmatprep.subr.bf16.mxu0 %v2519
    %2845 = vmatpush1.bf16.msra.mxu0 %v2518
    %2846 = vmatprep.subr.bf16.mxu0 %v2526
    %2847 = vmatpush1.bf16.msra.mxu0 %v2525
    %2848 = vmatprep.subr.bf16.mxu0 %v2533
    %2849 = vmatpush1.bf16.msra.mxu0 %v2532
    %2850 = vmatprep.subr.bf16.mxu0 %v2540
    %2851 = vmatpush1.bf16.msra.mxu0 %v2539
    %2852 = vmatprep.subr.bf16.mxu0 %v2547
    %2853 = vmatpush1.bf16.msra.mxu0 %v2546
    %2854 = vmatprep.subr.bf16.mxu0 %v2554
    %2855 = vmatpush1.bf16.msra.mxu0 %v2553
    %2856 = vmatprep.subr.bf16.mxu0 %v2561
    %2857 = vmatpush1.bf16.msra.mxu0 %v2560
    %2858 = vmatprep.subr.bf16.mxu0 %v2568
    %2859 = vmatpush1.bf16.msra.mxu0 %v2567
    %2860 = vmatprep.subr.bf16.mxu0 %v2575
    %2861 = vmatpush1.bf16.msra.mxu0 %v2574
    %2862 = vmatprep.subr.bf16.mxu0 %v2582
    %2863 = vmatpush1.bf16.msra.mxu0 %v2581
    %2864 = vmatprep.subr.bf16.mxu0 %v2589
    %2865 = vmatpush1.bf16.msra.mxu0 %v2588
    %2866 = vmatprep.subr.bf16.mxu0 %v2596
    %2867 = vmatpush1.bf16.msra.mxu0 %v2595
    %2868 = vmatprep.subr.bf16.mxu0 %v2603
    %2869 = vmatpush1.bf16.msra.mxu0 %v2602
    %2870 = vmatprep.subr.bf16.mxu0 %v2610
    %2871 = vmatpush1.bf16.msra.mxu0 %v2609
    %2872 = vmatprep.mubr.bf16.mxu0 %v1745
    %2873 = vmatmul.mubr.bf16.gmra.mrb[0].mxu0 %v1744
    %v2874 = vpop.f32.mrb[0].mxu0
    %v2875 = vadd.f32 %v1944, %v2874
    %v2876 = vpop.f32.mrb[0].mxu0
    %v2877 = vadd.f32 %v1948, %v2876
    %v2878 = vpop.f32.mrb[0].mxu0
    %v2879 = vadd.f32 %v1944, %v2878
    %v2880 = vpop.f32.mrb[0].mxu0
    %v2881 = vadd.f32 %v1948, %v2880
    %2882 = vdwg.mxu0
    %2883 = vmatprep.subr.bf16.mxu0 %v2617
    %2884 = vmatpush1.bf16.msra.mxu0 %v2616
    %2885 = vmatprep.subr.bf16.mxu0 %v2624
    %2886 = vmatpush1.bf16.msra.mxu0 %v2623
    %2887 = vmatprep.subr.bf16.mxu0 %v2631
    %2888 = vmatpush1.bf16.msra.mxu0 %v2630
    %2889 = vmatprep.subr.bf16.mxu0 %v2638
    %2890 = vmatpush1.bf16.msra.mxu0 %v2637
    %2891 = vmatprep.subr.bf16.mxu0 %v2645
    %2892 = vmatpush1.bf16.msra.mxu0 %v2644
    %2893 = vmatprep.subr.bf16.mxu0 %v2652
    %2894 = vmatpush1.bf16.msra.mxu0 %v2651
    %2895 = vmatprep.subr.bf16.mxu0 %v2659
    %2896 = vmatpush1.bf16.msra.mxu0 %v2658
    %2897 = vmatprep.subr.bf16.mxu0 %v2666
    %2898 = vmatpush1.bf16.msra.mxu0 %v2665
    %2899 = vmatprep.subr.bf16.mxu0 0
    %2900 = vmatpush1.bf16.msra.mxu0 0
    %2901 = vmatprep.subr.bf16.mxu0 0
    %2902 = vmatpush1.bf16.msra.mxu0 0
    %2903 = vmatprep.subr.bf16.mxu0 0
    %2904 = vmatpush1.bf16.msra.mxu0 0
    %2905 = vmatprep.subr.bf16.mxu0 0
    %2906 = vmatpush1.bf16.msra.mxu0 0
    %2907 = vmatprep.subr.bf16.mxu0 0
    %2908 = vmatpush1.bf16.msra.mxu0 0
    %2909 = vmatprep.subr.bf16.mxu0 0
    %2910 = vmatpush1.bf16.msra.mxu0 0
    %2911 = vmatprep.subr.bf16.mxu0 0
    %2912 = vmatpush1.bf16.msra.mxu0 0
    %2913 = vmatprep.subr.bf16.mxu0 0
    %2914 = vmatpush1.bf16.msra.mxu0 0
    %2915 = vmatprep.mubr.bf16.mxu0 0
    %2916 = vmatmul.mubr.bf16.gmra.mrb[0].mxu0 %v1746
    %v2917 = vpop.f32.mrb[0].mxu0
    %v2918 = vadd.f32 %v2875, %v2917
    %v2919 = vpop.f32.mrb[0].mxu0
    %v2920 = vadd.f32 %v2877, %v2919
    %v2921 = vpop.f32.mrb[0].mxu0
    %v2922 = vadd.f32 %v2879, %v2921
    %v2923 = vpop.f32.mrb[0].mxu0
    %v2924 = vadd.f32 %v2881, %v2923
    %2925 = vdwg.mxu0
    %2926 = vmatprep.subr.bf16.mxu0 %v2507
    %2927 = vmatpush1.bf16.msra.mxu0 %v2506
    %2928 = vmatprep.subr.bf16.mxu0 %v2514
    %2929 = vmatpush1.bf16.msra.mxu0 %v2513
    %2930 = vmatprep.subr.bf16.mxu0 %v2521
    %2931 = vmatpush1.bf16.msra.mxu0 %v2520
    %2932 = vmatprep.subr.bf16.mxu0 %v2528
    %2933 = vmatpush1.bf16.msra.mxu0 %v2527
    %2934 = vmatprep.subr.bf16.mxu0 %v2535
    %2935 = vmatpush1.bf16.msra.mxu0 %v2534
    %2936 = vmatprep.subr.bf16.mxu0 %v2542
    %2937 = vmatpush1.bf16.msra.mxu0 %v2541
    %2938 = vmatprep.subr.bf16.mxu0 %v2549
    %2939 = vmatpush1.bf16.msra.mxu0 %v2548
    %2940 = vmatprep.subr.bf16.mxu0 %v2556
    %2941 = vmatpush1.bf16.msra.mxu0 %v2555
    %2942 = vmatprep.subr.bf16.mxu0 %v2563
    %2943 = vmatpush1.bf16.msra.mxu0 %v2562
    %2944 = vmatprep.subr.bf16.mxu0 %v2570
    %2945 = vmatpush1.bf16.msra.mxu0 %v2569
    %2946 = vmatprep.subr.bf16.mxu0 %v2577
    %2947 = vmatpush1.bf16.msra.mxu0 %v2576
    %2948 = vmatprep.subr.bf16.mxu0 %v2584
    %2949 = vmatpush1.bf16.msra.mxu0 %v2583
    %2950 = vmatprep.subr.bf16.mxu0 %v2591
    %2951 = vmatpush1.bf16.msra.mxu0 %v2590
    %2952 = vmatprep.subr.bf16.mxu0 %v2598
    %2953 = vmatpush1.bf16.msra.mxu0 %v2597
    %2954 = vmatprep.subr.bf16.mxu0 %v2605
    %2955 = vmatpush1.bf16.msra.mxu0 %v2604
    %2956 = vmatprep.subr.bf16.mxu0 %v2612
    %2957 = vmatpush1.bf16.msra.mxu0 %v2611
    %2958 = vmatprep.mubr.bf16.mxu0 %v1745
    %2959 = vmatmul.mubr.bf16.gmra.mrb[0].mxu0 %v1744
    %v2960 = vpop.f32.mrb[0].mxu0
    %v2961 = vadd.f32 %v1952, %v2960
    %v2962 = vpop.f32.mrb[0].mxu0
    %v2963 = vadd.f32 %v1956, %v2962
    %v2964 = vpop.f32.mrb[0].mxu0
    %v2965 = vadd.f32 %v1952, %v2964
    %v2966 = vpop.f32.mrb[0].mxu0
    %v2967 = vadd.f32 %v1956, %v2966
    %2968 = vdwg.mxu0
    %2969 = vmatprep.subr.bf16.mxu0 %v2619
    %2970 = vmatpush1.bf16.msra.mxu0 %v2618
    %2971 = vmatprep.subr.bf16.mxu0 %v2626
    %2972 = vmatpush1.bf16.msra.mxu0 %v2625
    %2973 = vmatprep.subr.bf16.mxu0 %v2633
    %2974 = vmatpush1.bf16.msra.mxu0 %v2632
    %2975 = vmatprep.subr.bf16.mxu0 %v2640
    %2976 = vmatpush1.bf16.msra.mxu0 %v2639
    %2977 = vmatprep.subr.bf16.mxu0 %v2647
    %2978 = vmatpush1.bf16.msra.mxu0 %v2646
    %2979 = vmatprep.subr.bf16.mxu0 %v2654
    %2980 = vmatpush1.bf16.msra.mxu0 %v2653
    %2981 = vmatprep.subr.bf16.mxu0 %v2661
    %2982 = vmatpush1.bf16.msra.mxu0 %v2660
    %2983 = vmatprep.subr.bf16.mxu0 %v2668
    %2984 = vmatpush1.bf16.msra.mxu0 %v2667
    %2985 = vmatprep.subr.bf16.mxu0 0
    %2986 = vmatpush1.bf16.msra.mxu0 0
    %2987 = vmatprep.subr.bf16.mxu0 0
    %2988 = vmatpush1.bf16.msra.mxu0 0
    %2989 = vmatprep.subr.bf16.mxu0 0
    %2990 = vmatpush1.bf16.msra.mxu0 0
    %2991 = vmatprep.subr.bf16.mxu0 0
    %2992 = vmatpush1.bf16.msra.mxu0 0
    %2993 = vmatprep.subr.bf16.mxu0 0
    %2994 = vmatpush1.bf16.msra.mxu0 0
    %2995 = vmatprep.subr.bf16.mxu0 0
    %2996 = vmatpush1.bf16.msra.mxu0 0
    %2997 = vmatprep.subr.bf16.mxu0 0
    %2998 = vmatpush1.bf16.msra.mxu0 0
    %2999 = vmatprep.subr.bf16.mxu0 0
    %3000 = vmatpush1.bf16.msra.mxu0 0
    %3001 = vmatprep.mubr.bf16.mxu0 0
    %3002 = vmatmul.mubr.bf16.gmra.mrb[0].mxu0 %v1746
    %v3003 = vpop.f32.mrb[0].mxu0
    %v3004 = vadd.f32 %v2961, %v3003
    %v3005 = vpop.f32.mrb[0].mxu0
    %v3006 = vadd.f32 %v2963, %v3005
    %v3007 = vpop.f32.mrb[0].mxu0
    %v3008 = vadd.f32 %v2965, %v3007
    %v3009 = vpop.f32.mrb[0].mxu0
    %v3010 = vadd.f32 %v2967, %v3009
    %3011 = vdwg.mxu0
    %3012 = vmatprep.subr.bf16.mxu0 %v2509
    %3013 = vmatpush1.bf16.msra.mxu0 %v2508
    %3014 = vmatprep.subr.bf16.mxu0 %v2516
    %3015 = vmatpush1.bf16.msra.mxu0 %v2515
    %3016 = vmatprep.subr.bf16.mxu0 %v2523
    %3017 = vmatpush1.bf16.msra.mxu0 %v2522
    %3018 = vmatprep.subr.bf16.mxu0 %v2530
    %3019 = vmatpush1.bf16.msra.mxu0 %v2529
    %3020 = vmatprep.subr.bf16.mxu0 %v2537
    %3021 = vmatpush1.bf16.msra.mxu0 %v2536
    %3022 = vmatprep.subr.bf16.mxu0 %v2544
    %3023 = vmatpush1.bf16.msra.mxu0 %v2543
    %3024 = vmatprep.subr.bf16.mxu0 %v2551
    %3025 = vmatpush1.bf16.msra.mxu0 %v2550
    %3026 = vmatprep.subr.bf16.mxu0 %v2558
    %3027 = vmatpush1.bf16.msra.mxu0 %v2557
    %3028 = vmatprep.subr.bf16.mxu0 %v2565
    %3029 = vmatpush1.bf16.msra.mxu0 %v2564
    %3030 = vmatprep.subr.bf16.mxu0 %v2572
    %3031 = vmatpush1.bf16.msra.mxu0 %v2571
    %3032 = vmatprep.subr.bf16.mxu0 %v2579
    %3033 = vmatpush1.bf16.msra.mxu0 %v2578
    %3034 = vmatprep.subr.bf16.mxu0 %v2586
    %3035 = vmatpush1.bf16.msra.mxu0 %v2585
    %3036 = vmatprep.subr.bf16.mxu0 %v2593
    %3037 = vmatpush1.bf16.msra.mxu0 %v2592
    %3038 = vmatprep.subr.bf16.mxu0 %v2600
    %3039 = vmatpush1.bf16.msra.mxu0 %v2599
    %3040 = vmatprep.subr.bf16.mxu0 %v2607
    %3041 = vmatpush1.bf16.msra.mxu0 %v2606
    %3042 = vmatprep.subr.bf16.mxu0 %v2614
    %3043 = vmatpush1.bf16.msra.mxu0 %v2613
    %3044 = vmatprep.mubr.bf16.mxu0 %v1745
    %3045 = vmatmul.mubr.bf16.gmra.mrb[0].mxu0 %v1744
    %v3046 = vpop.f32.mrb[0].mxu0
    %v3047 = vadd.f32 %v1960, %v3046
    %v3048 = vpop.f32.mrb[0].mxu0
    %v3049 = vadd.f32 %v1964, %v3048
    %v3050 = vpop.f32.mrb[0].mxu0
    %v3051 = vadd.f32 %v1960, %v3050
    %v3052 = vpop.f32.mrb[0].mxu0
    %v3053 = vadd.f32 %v1964, %v3052
    %3054 = vdwg.mxu0
    %3055 = vmatprep.subr.bf16.mxu0 %v2621
    %3056 = vmatpush1.bf16.msra.mxu0 %v2620
    %3057 = vmatprep.subr.bf16.mxu0 %v2628
    %3058 = vmatpush1.bf16.msra.mxu0 %v2627
    %3059 = vmatprep.subr.bf16.mxu0 %v2635
    %3060 = vmatpush1.bf16.msra.mxu0 %v2634
    %3061 = vmatprep.subr.bf16.mxu0 %v2642
    %3062 = vmatpush1.bf16.msra.mxu0 %v2641
    %3063 = vmatprep.subr.bf16.mxu0 %v2649
    %3064 = vmatpush1.bf16.msra.mxu0 %v2648
    %3065 = vmatprep.subr.bf16.mxu0 %v2656
    %3066 = vmatpush1.bf16.msra.mxu0 %v2655
    %3067 = vmatprep.subr.bf16.mxu0 %v2663
    %3068 = vmatpush1.bf16.msra.mxu0 %v2662
    %3069 = vmatprep.subr.bf16.mxu0 %v2670
    %3070 = vmatpush1.bf16.msra.mxu0 %v2669
    %3071 = vmatprep.subr.bf16.mxu0 0
    %3072 = vmatpush1.bf16.msra.mxu0 0
    %3073 = vmatprep.subr.bf16.mxu0 0
    %3074 = vmatpush1.bf16.msra.mxu0 0
    %3075 = vmatprep.subr.bf16.mxu0 0
    %3076 = vmatpush1.bf16.msra.mxu0 0
    %3077 = vmatprep.subr.bf16.mxu0 0
    %3078 = vmatpush1.bf16.msra.mxu0 0
    %3079 = vmatprep.subr.bf16.mxu0 0
    %3080 = vmatpush1.bf16.msra.mxu0 0
    %3081 = vmatprep.subr.bf16.mxu0 0
    %3082 = vmatpush1.bf16.msra.mxu0 0
    %3083 = vmatprep.subr.bf16.mxu0 0
    %3084 = vmatpush1.bf16.msra.mxu0 0
    %3085 = vmatprep.subr.bf16.mxu0 0
    %3086 = vmatpush1.bf16.msra.mxu0 0
    %3087 = vmatprep.mubr.bf16.mxu0 0
    %3088 = vmatmul.mubr.bf16.gmra.mrb[0].mxu0 %v1746
    %v3089 = vpop.f32.mrb[0].mxu0
    %v3090 = vadd.f32 %v3047, %v3089
    %v3091 = vpop.f32.mrb[0].mxu0
    %v3092 = vadd.f32 %v3049, %v3091
    %v3093 = vpop.f32.mrb[0].mxu0
    %v3094 = vadd.f32 %v3051, %v3093
    %v3095 = vpop.f32.mrb[0].mxu0
    %v3096 = vadd.f32 %v3053, %v3095
    %3097 = vdwg.mxu0
    %3098 = vmatprep.subr.bf16.mxu0 0
    %3099 = vmatpush1.bf16.msra.mxu0 %v2510
    %3100 = vmatprep.subr.bf16.mxu0 0
    %3101 = vmatpush1.bf16.msra.mxu0 %v2517
    %3102 = vmatprep.subr.bf16.mxu0 0
    %3103 = vmatpush1.bf16.msra.mxu0 %v2524
    %3104 = vmatprep.subr.bf16.mxu0 0
    %3105 = vmatpush1.bf16.msra.mxu0 %v2531
    %3106 = vmatprep.subr.bf16.mxu0 0
    %3107 = vmatpush1.bf16.msra.mxu0 %v2538
    %3108 = vmatprep.subr.bf16.mxu0 0
    %3109 = vmatpush1.bf16.msra.mxu0 %v2545
    %3110 = vmatprep.subr.bf16.mxu0 0
    %3111 = vmatpush1.bf16.msra.mxu0 %v2552
    %3112 = vmatprep.subr.bf16.mxu0 0
    %3113 = vmatpush1.bf16.msra.mxu0 %v2559
    %3114 = vmatprep.subr.bf16.mxu0 0
    %3115 = vmatpush1.bf16.msra.mxu0 %v2566
    %3116 = vmatprep.subr.bf16.mxu0 0
    %3117 = vmatpush1.bf16.msra.mxu0 %v2573
    %3118 = vmatprep.subr.bf16.mxu0 0
    %3119 = vmatpush1.bf16.msra.mxu0 %v2580
    %3120 = vmatprep.subr.bf16.mxu0 0
    %3121 = vmatpush1.bf16.msra.mxu0 %v2587
    %3122 = vmatprep.subr.bf16.mxu0 0
    %3123 = vmatpush1.bf16.msra.mxu0 %v2594
    %3124 = vmatprep.subr.bf16.mxu0 0
    %3125 = vmatpush1.bf16.msra.mxu0 %v2601
    %3126 = vmatprep.subr.bf16.mxu0 0
    %3127 = vmatpush1.bf16.msra.mxu0 %v2608
    %3128 = vmatprep.subr.bf16.mxu0 0
    %3129 = vmatpush1.bf16.msra.mxu0 %v2615
    %3130 = vmatprep.mubr.bf16.mxu0 %v1745
    %3131 = vmatmul.mubr.bf16.gmra.mrb[0].mxu0 %v1744
    %v3132 = vpop.f32.mrb[0].mxu0
    %v3133 = vadd.f32 %v1968, %v3132
    %v3134 = vpop.f32.mrb[0].mxu0
    %v3135 = vpop.f32.mrb[0].mxu0
    %v3136 = vadd.f32 %v1968, %v3135
    %v3137 = vpop.f32.mrb[0].mxu0
    %3138 = vdwg.mxu0
    %3139 = vmatprep.subr.bf16.mxu0 0
    %3140 = vmatpush1.bf16.msra.mxu0 %v2622
    %3141 = vmatprep.subr.bf16.mxu0 0
    %3142 = vmatpush1.bf16.msra.mxu0 %v2629
    %3143 = vmatprep.subr.bf16.mxu0 0
    %3144 = vmatpush1.bf16.msra.mxu0 %v2636
    %3145 = vmatprep.subr.bf16.mxu0 0
    %3146 = vmatpush1.bf16.msra.mxu0 %v2643
    %3147 = vmatprep.subr.bf16.mxu0 0
    %3148 = vmatpush1.bf16.msra.mxu0 %v2650
    %3149 = vmatprep.subr.bf16.mxu0 0
    %3150 = vmatpush1.bf16.msra.mxu0 %v2657
    %3151 = vmatprep.subr.bf16.mxu0 0
    %3152 = vmatpush1.bf16.msra.mxu0 %v2664
    %3153 = vmatprep.subr.bf16.mxu0 0
    %3154 = vmatpush1.bf16.msra.mxu0 %v2671
    %3155 = vmatprep.subr.bf16.mxu0 0
    %3156 = vmatpush1.bf16.msra.mxu0 0
    %3157 = vmatprep.subr.bf16.mxu0 0
    %3158 = vmatpush1.bf16.msra.mxu0 0
    %3159 = vmatprep.subr.bf16.mxu0 0
    %3160 = vmatpush1.bf16.msra.mxu0 0
    %3161 = vmatprep.subr.bf16.mxu0 0
    %3162 = vmatpush1.bf16.msra.mxu0 0
    %3163 = vmatprep.subr.bf16.mxu0 0
    %3164 = vmatpush1.bf16.msra.mxu0 0
    %3165 = vmatprep.subr.bf16.mxu0 0
    %3166 = vmatpush1.bf16.msra.mxu0 0
    %3167 = vmatprep.subr.bf16.mxu0 0
    %3168 = vmatpush1.bf16.msra.mxu0 0
    %3169 = vmatprep.subr.bf16.mxu0 0
    %3170 = vmatpush1.bf16.msra.mxu0 0
    %3171 = vmatprep.mubr.bf16.mxu0 0
    %3172 = vmatmul.mubr.bf16.gmra.mrb[0].mxu0 %v1746
    %v3173 = vpop.f32.mrb[0].mxu0
    %v3174 = vadd.f32 %v3133, %v3173
    %v3175 = vpop.f32.mrb[0].mxu0
    %v3176 = vpop.f32.mrb[0].mxu0
    %v3177 = vadd.f32 %v3136, %v3176
    %v3178 = vpop.f32.mrb[0].mxu0
    %3179 = vdwg.mxu0
    %v3180 = vmax.f32 %v2918, 0.0
    %v3181 = vmax.f32 %v2920, 0.0
    %v3182 = vmax.f32 %v3004, 0.0
    %v3183 = vmax.f32 %v3006, 0.0
    %v3184 = vmax.f32 %v3090, 0.0
    %v3185 = vmax.f32 %v3092, 0.0
    %v3186 = vmax.f32 %v3174, 0.0
    %v3187 = vmax.f32 %v2922, 0.0
    %v3188 = vmax.f32 %v2924, 0.0
    %v3189 = vmax.f32 %v3008, 0.0
    %v3190 = vmax.f32 %v3010, 0.0
    %v3191 = vmax.f32 %v3094, 0.0
    %v3192 = vmax.f32 %v3096, 0.0
    %v3193 = vmax.f32 %v3177, 0.0
    %v3194 = vpack.c.bf16 %v3187, %v3180
    %v3195 = vpack.c.bf16 %v3188, %v3181
    %v3196 = vpack.c.bf16 %v3189, %v3182
    %v3197 = vpack.c.bf16 %v3190, %v3183
    %v3198 = vpack.c.bf16 %v3191, %v3184
    %v3199 = vpack.c.bf16 %v3192, %v3185
    %v3200 = vpack.c.bf16 %v3193, %v3186
    %v3208 = vunpack.c.l.b16 %v3194
    %v3209 = vunpack.c.l.b16 %v3195
    %v3210 = vunpack.c.l.b16 %v3196
    %v3211 = vunpack.c.l.b16 %v3197
    %v3212 = vunpack.c.l.b16 %v3198
    %v3213 = vunpack.c.l.b16 %v3199
    %v3214 = vunpack.c.l.b16 %v3200
    %v3215 = vunpack.c.h.b16 %v3194
    %v3216 = vunpack.c.h.b16 %v3195
    %v3217 = vunpack.c.h.b16 %v3196
    %v3218 = vunpack.c.h.b16 %v3197
    %v3219 = vunpack.c.h.b16 %v3198
    %v3220 = vunpack.c.h.b16 %v3199
    %v3221 = vunpack.c.h.b16 %v3200
    %v3222 = vpack.c.b16 %v3209, %v3208
    %v3223 = vpack.c.b16 %v3211, %v3210
    %v3224 = vpack.c.b16 %v3213, %v3212
    %v3225 = vpack.c.b16 %v3214, %v3214
    %v3226 = vpack.c.b16 %v3216, %v3215
    %v3227 = vpack.c.b16 %v3218, %v3217
    %v3228 = vpack.c.b16 %v3220, %v3219
    %v3229 = vpack.c.b16 %v3221, %v3221
    %3238 = vst [vmem:[#allocation8] sm:$0xff] %v3222
    %3239 = vst [vmem:[#allocation8 + $0x8] sm:$0xff] %v3223
    %3240 = vst [vmem:[#allocation8 + $0x10] sm:$0xff] %v3224
    %3241 = vst [vmem:[#allocation8 + $0x18] sm:$0xf] %v3225
    %3242 = vst [vmem:[#allocation8 + $0x1c] sm:$0xff] %v3226
    %3243 = vst [vmem:[#allocation8 + $0x24] sm:$0xff] %v3227
    %3244 = vst [vmem:[#allocation8 + $0x2c] sm:$0xff] %v3228
    %3245 = vst [vmem:[#allocation8 + $0x34] sm:$0xf] %v3229
    // Predicated region
    $region34: #{tpu_custom_call.1} parent=1 // pred_check
      _
    $region35: #{tpu_custom_call.1} parent=1 // pred_check_branch
      %3247 = sbr.rel (0) target = $region37
    $region36: #{tpu_custom_call.1} parent=1 // pred_region
      %s3249 = ssub.s32 896, 896
      %3250 = vsyncadd [#allocation4], %s3249
      %s3251 = sshll.u32 [#allocation8], 4
      %s3252 = int_to_ptr.vmem [resolvable:$true] %s3251
      %3257 = dma.vmem_to_hbm [thread:$0]  %s3252, 896, %s5, [#allocation4], 448, 448, 28
    $region37: #{tpu_custom_call.1} parent=1 // pred_fallthru
      _
    // Predicated region
    $region38: #{tpu_custom_call.1} parent=1 // pred_check
      _
    $region39: #{tpu_custom_call.1} parent=1 // pred_check_branch
      %3259 = sbr.rel (0) target = $region41
    $region40: #{tpu_custom_call.1} parent=1 // pred_region
      %3260 = dma.done [#allocation4], 896
    $region41: #{tpu_custom_call.1} parent=1 // pred_fallthru
      _
    %3261 = vsyncpa [#allocation3], 1
    %3262 = vsyncpa [#allocation6], 1
    %3263 = vsyncpa [#allocation4], 1

</llo_original>
